<compile_context>
chip_gen: v7x
topology: tpu7x:2x2x1
jax: 0.10.0
libtpu: 0.0.40
codegen_flags: <defaults>
</compile_context>

<pallas_src>
import functools
import math

import jax
import jax.numpy as jnp
from jax.experimental import pallas as pl
from jax.experimental.pallas import tpu as pltpu


# ----------------------------------------------------------------------------
# Pallas kernel: one full bidirectional GRU layer (all timesteps, both directions)
# ----------------------------------------------------------------------------
def _gru_bidir_layer_kernel(
    x2_ref,        # (S*Bp, E)   layer input, time-major rows of Bp
    mask_ref,      # (S, Bp, H)  1.0 where t < length[b], else 0.0
    wi_f_ref, wh_f_ref, bi_f_ref, bh_f_ref,   # forward dir: (E,3H) (H,3H) (1,3H) (1,3H)
    wi_b_ref, wh_b_ref, bi_b_ref, bh_b_ref,   # backward dir
    out_f_ref,     # (S, Bp, H)  forward-direction outputs (zero past length)
    out_b_ref,     # (S, Bp, H)  backward-direction outputs (zero past length)
    xp_f_scr,      # (S*Bp, 3H)  VMEM: precomputed x @ W_ih + b_ih (forward)
    xp_b_scr,      # (S*Bp, 3H)  VMEM: same for backward
    h_f_scr,       # (Bp, H)     VMEM: forward hidden state
    h_b_scr,       # (Bp, H)     VMEM: backward hidden state
):
    S, Bp, H = out_f_ref.shape

    # Batched input projection for all timesteps / both directions: 2 MXU matmuls.
    x2 = x2_ref[...]
    xp_f_scr[...] = (
        jnp.dot(x2, wi_f_ref[...], preferred_element_type=jnp.float32) + bi_f_ref[...]
    )
    xp_b_scr[...] = (
        jnp.dot(x2, wi_b_ref[...], preferred_element_type=jnp.float32) + bi_b_ref[...]
    )
    h_f_scr[...] = jnp.zeros_like(h_f_scr)
    h_b_scr[...] = jnp.zeros_like(h_b_scr)

    def gru_cell(xp, h, wh_ref, bh_ref):
        # PyTorch GRU gate math, gate order [r | z | n] along the last axis.
        hp = jnp.dot(h, wh_ref[...], preferred_element_type=jnp.float32) + bh_ref[...]
        r = jax.nn.sigmoid(xp[:, :H] + hp[:, :H])
        z = jax.nn.sigmoid(xp[:, H:2 * H] + hp[:, H:2 * H])
        n = jnp.tanh(xp[:, 2 * H:] + r * hp[:, 2 * H:])
        return (1.0 - z) * n + z * h

    @pl.loop(0, S)
    def _(t):
        # ---------- forward direction, time t ----------
        row_f = pl.multiple_of(t * Bp, Bp)
        m_f = mask_ref[t]                                   # (Bp, H)
        h_f = h_f_scr[...]
        h_new_f = gru_cell(xp_f_scr[pl.ds(row_f, Bp), :], h_f, wh_f_ref, bh_f_ref)
        out_f_ref[t] = h_new_f * m_f                        # zeros past sequence end
        h_f_scr[...] = h_new_f * m_f + h_f * (1.0 - m_f)    # freeze state past end

        # ---------- backward direction, time S-1-t ----------
        tb = S - 1 - t
        row_b = pl.multiple_of(tb * Bp, Bp)
        m_b = mask_ref[tb]
        h_b = h_b_scr[...]
        h_new_b = gru_cell(xp_b_scr[pl.ds(row_b, Bp), :], h_b, wh_b_ref, bh_b_ref)
        out_b_ref[tb] = h_new_b * m_b
        h_b_scr[...] = h_new_b * m_b + h_b * (1.0 - m_b)


def _gru_bidir_layer(x, mask3, lw, hid_dim):
    S, Bp, E = x.shape
    H = hid_dim
    x2 = x.reshape(S * Bp, E)
    out_f, out_b = pl.pallas_call(
        _gru_bidir_layer_kernel,
        out_shape=(
            jax.ShapeDtypeStruct((S, Bp, H), jnp.float32),
            jax.ShapeDtypeStruct((S, Bp, H), jnp.float32),
        ),
        scratch_shapes=[
            pltpu.VMEM((S * Bp, 3 * H), jnp.float32),
            pltpu.VMEM((S * Bp, 3 * H), jnp.float32),
            pltpu.VMEM((Bp, H), jnp.float32),
            pltpu.VMEM((Bp, H), jnp.float32),
        ],
    )(
        x2, mask3,
        lw["wi_f"], lw["wh_f"], lw["bi_f"], lw["bh_f"],
        lw["wi_b"], lw["wh_b"], lw["bi_b"], lw["bh_b"],
    )
    return out_f, out_b


# ----------------------------------------------------------------------------
# Encoder forward (embedding gather + per-layer fused GRU kernel + direction sums)
# ----------------------------------------------------------------------------
@functools.partial(jax.jit, static_argnames=("hid_dim", "n_layers"))
def encoder_forward(params, src, lens, *, hid_dim, n_layers):
    """src: (S, B) int32, lens: (B,) int32 with max(lens) == S."""
    S, B = src.shape
    Bp = ((B + 7) // 8) * 8                     # pad batch to a sublane multiple

    # Embedding lookup (gather left to XLA) + dropout (identity in eval).
    emb = jnp.take(params["embedding"], src, axis=0)          # (S, B, E)
    if Bp != B:
        emb = jnp.pad(emb, ((0, 0), (0, Bp - B), (0, 0)))
        lens = jnp.pad(lens, (0, Bp - B))                     # padded rows: length 0

    # pack_padded_sequence / pad_packed_sequence as an explicit length mask.
    valid = (jnp.arange(S, dtype=jnp.int32)[:, None] < lens[None, :]).astype(jnp.float32)
    mask3 = jnp.broadcast_to(valid[:, :, None], (S, Bp, hid_dim))

    x = emb
    out_f = out_b = None
    for layer in range(n_layers):
        out_f, out_b = _gru_bidir_layer(x, mask3, params["layers"][layer], hid_dim)
        x = jnp.concatenate([out_f, out_b], axis=-1)          # next layer input (S,Bp,2H)
        # TODO(synk): inter-layer GRU dropout (training mode only) is identity here.

    output = (out_f + out_b)[:, :B, :]                        # output[:,:,H:] + output[:,:,:H]
    problem_output = (out_f[-1] + out_b[0])[:B, :]            # output[-1,:,:H] + output[0,:,H:]
    return output, problem_output


# ----------------------------------------------------------------------------
# Deterministic parameter construction (PyTorch-style uniform init, f32)
# ----------------------------------------------------------------------------
def make_params(key, input_dim, emb_dim, hid_dim, n_layers):
    k_emb, k_rest = jax.random.split(key)
    bound = 1.0 / math.sqrt(hid_dim)

    def u(k, shape):
        return jax.random.uniform(k, shape, jnp.float32, minval=-bound, maxval=bound)

    params = {
        "embedding": (jax.random.normal(k_emb, (input_dim, emb_dim)) * 0.1).astype(jnp.float32),
        "layers": [],
    }
    in_size = emb_dim
    for layer in range(n_layers):
        ks = jax.random.split(jax.random.fold_in(k_rest, layer), 8)
        params["layers"].append({
            "wi_f": u(ks[0], (in_size, 3 * hid_dim)),
            "wh_f": u(ks[1], (hid_dim, 3 * hid_dim)),
            "bi_f": u(ks[2], (1, 3 * hid_dim)),
            "bh_f": u(ks[3], (1, 3 * hid_dim)),
            "wi_b": u(ks[4], (in_size, 3 * hid_dim)),
            "wh_b": u(ks[5], (hid_dim, 3 * hid_dim)),
            "bi_b": u(ks[6], (1, 3 * hid_dim)),
            "bh_b": u(ks[7], (1, 3 * hid_dim)),
        })
        in_size = 2 * hid_dim
    return params


if __name__ == "__main__":
    key = jax.random.PRNGKey(0)
    INPUT_DIM, EMB_DIM, HID_DIM, N_LAYERS = 20, 32, 32, 2
    S, B = 16, 2
    input_length = [16, 12]        # descending (pack_padded_sequence contract); max == S

    k_param, k_src = jax.random.split(key)
    params = make_params(k_param, INPUT_DIM, EMB_DIM, HID_DIM, N_LAYERS)
    src = jax.random.randint(k_src, (S, B), 0, INPUT_DIM, dtype=jnp.int32)
    lens = jnp.asarray(input_length, dtype=jnp.int32)

    output, problem_output = encoder_forward(
        params, src, lens, hid_dim=HID_DIM, n_layers=N_LAYERS)
    output, problem_output = jax.block_until_ready((output, problem_output))

    assert output.shape == (S, B, HID_DIM)
    assert problem_output.shape == (B, HID_DIM)
    assert bool(jnp.all(jnp.isfinite(output)))
    assert bool(jnp.all(jnp.isfinite(problem_output)))
    # padded timesteps of the shorter sequence must be exactly zero (pad_packed_sequence)
    assert bool(jnp.all(output[input_length[1]:, 1, :] == 0.0))
    print("KERNEL_OK")
</pallas_src>

<mosaic_0001>
module attributes {stable_mosaic.version = 11 : i64} {
  func.func @_gru_bidir_layer_kernel(%arg0: memref<128x32xf32, #tpu.memory_space<vmem>>, %arg1: memref<16x8x32xf32, #tpu.memory_space<vmem>>, %arg2: memref<32x96xf32, #tpu.memory_space<vmem>>, %arg3: memref<32x96xf32, #tpu.memory_space<vmem>>, %arg4: memref<1x96xf32, #tpu.memory_space<vmem>>, %arg5: memref<1x96xf32, #tpu.memory_space<vmem>>, %arg6: memref<32x96xf32, #tpu.memory_space<vmem>>, %arg7: memref<32x96xf32, #tpu.memory_space<vmem>>, %arg8: memref<1x96xf32, #tpu.memory_space<vmem>>, %arg9: memref<1x96xf32, #tpu.memory_space<vmem>>, %arg10: memref<16x8x32xf32, #tpu.memory_space<vmem>>, %arg11: memref<16x8x32xf32, #tpu.memory_space<vmem>>, %arg12: memref<128x96xf32, #tpu.memory_space<vmem>>, %arg13: memref<128x96xf32, #tpu.memory_space<vmem>>, %arg14: memref<8x32xf32, #tpu.memory_space<vmem>>, %arg15: memref<8x32xf32, #tpu.memory_space<vmem>>) attributes {dimension_semantics = [], scalar_prefetch = 0 : i64, scratch_operands = 4 : i64, tpu.core_type = #tpu.core_type<tc>} {
    %c0 = arith.constant 0 : index
    %c0_0 = arith.constant 0 : index
    %0 = vector.load %arg0[%c0, %c0_0] : memref<128x32xf32, #tpu.memory_space<vmem>>, vector<128x32xf32>
    %c0_1 = arith.constant 0 : index
    %c0_2 = arith.constant 0 : index
    %1 = vector.load %arg2[%c0_1, %c0_2] : memref<32x96xf32, #tpu.memory_space<vmem>>, vector<32x96xf32>
    %cst = arith.constant dense<0.000000e+00> : vector<128x96xf32>
    %2 = tpu.matmul %0, %1, %cst {dimension_numbers = #tpu.dot_dimension_numbers<[1], [0], [0], [1], [0, 0, 1, 1], [], []>} : vector<128x32xf32>, vector<32x96xf32>, vector<128x96xf32> -> vector<128x96xf32>
    %c0_3 = arith.constant 0 : index
    %c0_4 = arith.constant 0 : index
    %3 = vector.load %arg4[%c0_3, %c0_4] : memref<1x96xf32, #tpu.memory_space<vmem>>, vector<1x96xf32>
    %4 = vector.broadcast %3 : vector<1x96xf32> to vector<128x96xf32>
    %5 = arith.addf %2, %4 : vector<128x96xf32>
    %c0_5 = arith.constant 0 : index
    %c0_6 = arith.constant 0 : index
    %6 = vector.load %arg12[%c0_5, %c0_6] : memref<128x96xf32, #tpu.memory_space<vmem>>, vector<128x96xf32>
    tpu.vector_store %arg12[%c0_5, %c0_6], %5 {strides = array<i32>} : memref<128x96xf32, #tpu.memory_space<vmem>>, vector<128x96xf32>,
    %c0_7 = arith.constant 0 : index
    %c0_8 = arith.constant 0 : index
    %7 = vector.load %arg6[%c0_7, %c0_8] : memref<32x96xf32, #tpu.memory_space<vmem>>, vector<32x96xf32>
    %cst_9 = arith.constant dense<0.000000e+00> : vector<128x96xf32>
    %8 = tpu.matmul %0, %7, %cst_9 {dimension_numbers = #tpu.dot_dimension_numbers<[1], [0], [0], [1], [0, 0, 1, 1], [], []>} : vector<128x32xf32>, vector<32x96xf32>, vector<128x96xf32> -> vector<128x96xf32>
    %c0_10 = arith.constant 0 : index
    %c0_11 = arith.constant 0 : index
    %9 = vector.load %arg8[%c0_10, %c0_11] : memref<1x96xf32, #tpu.memory_space<vmem>>, vector<1x96xf32>
    %10 = vector.broadcast %9 : vector<1x96xf32> to vector<128x96xf32>
    %11 = arith.addf %8, %10 : vector<128x96xf32>
    %c0_12 = arith.constant 0 : index
    %c0_13 = arith.constant 0 : index
    %12 = vector.load %arg13[%c0_12, %c0_13] : memref<128x96xf32, #tpu.memory_space<vmem>>, vector<128x96xf32>
    tpu.vector_store %arg13[%c0_12, %c0_13], %11 {strides = array<i32>} : memref<128x96xf32, #tpu.memory_space<vmem>>, vector<128x96xf32>,
    %cst_14 = arith.constant 0.000000e+00 : f32
    %13 = vector.broadcast %cst_14 : f32 to vector<8x32xf32>
    %c0_15 = arith.constant 0 : index
    %c0_16 = arith.constant 0 : index
    %14 = vector.load %arg14[%c0_15, %c0_16] : memref<8x32xf32, #tpu.memory_space<vmem>>, vector<8x32xf32>
    tpu.vector_store %arg14[%c0_15, %c0_16], %13 {strides = array<i32>} : memref<8x32xf32, #tpu.memory_space<vmem>>, vector<8x32xf32>,
    %cst_17 = arith.constant 0.000000e+00 : f32
    %15 = vector.broadcast %cst_17 : f32 to vector<8x32xf32>
    %c0_18 = arith.constant 0 : index
    %c0_19 = arith.constant 0 : index
    %16 = vector.load %arg15[%c0_18, %c0_19] : memref<8x32xf32, #tpu.memory_space<vmem>>, vector<8x32xf32>
    tpu.vector_store %arg15[%c0_18, %c0_19], %15 {strides = array<i32>} : memref<8x32xf32, #tpu.memory_space<vmem>>, vector<8x32xf32>,
    %c0_i32 = arith.constant 0 : i32
    %c16_i32 = arith.constant 16 : i32
    %17 = arith.addi %c0_i32, %c16_i32 : i32
    %c1_i32 = arith.constant 1 : i32
    scf.for %arg16 = %c0_i32 to %17 step %c1_i32  : i32 {
      %c1_i32_21 = arith.constant 1 : i32
      %18 = arith.muli %arg16, %c1_i32_21 : i32
      %c0_i32_22 = arith.constant 0 : i32
      %19 = arith.addi %c0_i32_22, %18 : i32
      %c8_i32 = arith.constant 8 : i32
      %20 = arith.muli %19, %c8_i32 : i32
      %21 = tpu.assume_multiple %20, 8 : i32
      %22 = arith.index_cast %19 : i32 to index
      %c0_23 = arith.constant 0 : index
      %c0_24 = arith.constant 0 : index
      %23 = vector.load %arg1[%22, %c0_23, %c0_24] : memref<16x8x32xf32, #tpu.memory_space<vmem>>, vector<1x8x32xf32>
      %24 = vector.shape_cast %23 : vector<1x8x32xf32> to vector<8x32xf32>
      %c0_25 = arith.constant 0 : index
      %c0_26 = arith.constant 0 : index
      %25 = vector.load %arg14[%c0_25, %c0_26] : memref<8x32xf32, #tpu.memory_space<vmem>>, vector<8x32xf32>
      %26 = arith.index_cast %21 : i32 to index
      %c0_27 = arith.constant 0 : index
      %27 = vector.load %arg12[%26, %c0_27] : memref<128x96xf32, #tpu.memory_space<vmem>>, vector<8x96xf32>
      %c0_28 = arith.constant 0 : index
      %c0_29 = arith.constant 0 : index
      %28 = vector.load %arg3[%c0_28, %c0_29] : memref<32x96xf32, #tpu.memory_space<vmem>>, vector<32x96xf32>
      %cst_30 = arith.constant dense<0.000000e+00> : vector<8x96xf32>
      %29 = tpu.matmul %25, %28, %cst_30 {dimension_numbers = #tpu.dot_dimension_numbers<[1], [0], [0], [1], [0, 0, 1, 1], [], []>} : vector<8x32xf32>, vector<32x96xf32>, vector<8x96xf32> -> vector<8x96xf32>
      %c0_31 = arith.constant 0 : index
      %c0_32 = arith.constant 0 : index
      %30 = vector.load %arg5[%c0_31, %c0_32] : memref<1x96xf32, #tpu.memory_space<vmem>>, vector<1x96xf32>
      %31 = vector.broadcast %30 : vector<1x96xf32> to vector<8x96xf32>
      %32 = arith.addf %29, %31 : vector<8x96xf32>
      %33 = vector.extract_strided_slice %27 {offsets = [0, 0], sizes = [8, 32], strides = [1, 1]} : vector<8x96xf32> to vector<8x32xf32>
      %34 = vector.extract_strided_slice %32 {offsets = [0, 0], sizes = [8, 32], strides = [1, 1]} : vector<8x96xf32> to vector<8x32xf32>
      %35 = arith.addf %33, %34 : vector<8x32xf32>
      %36 = arith.negf %35 : vector<8x32xf32>
      %37 = math.exp %36 : vector<8x32xf32>
      %cst_33 = arith.constant 1.000000e+00 : f32
      %38 = vector.broadcast %cst_33 : f32 to vector<8x32xf32>
      %39 = arith.addf %38, %37 : vector<8x32xf32>
      %40 = arith.divf %38, %39 : vector<8x32xf32>
      %41 = vector.extract_strided_slice %27 {offsets = [0, 32], sizes = [8, 32], strides = [1, 1]} : vector<8x96xf32> to vector<8x32xf32>
      %42 = vector.extract_strided_slice %32 {offsets = [0, 32], sizes = [8, 32], strides = [1, 1]} : vector<8x96xf32> to vector<8x32xf32>
      %43 = arith.addf %41, %42 : vector<8x32xf32>
      %44 = arith.negf %43 : vector<8x32xf32>
      %45 = math.exp %44 : vector<8x32xf32>
      %cst_34 = arith.constant 1.000000e+00 : f32
      %46 = vector.broadcast %cst_34 : f32 to vector<8x32xf32>
      %47 = arith.addf %46, %45 : vector<8x32xf32>
      %48 = arith.divf %46, %47 : vector<8x32xf32>
      %49 = vector.extract_strided_slice %27 {offsets = [0, 64], sizes = [8, 32], strides = [1, 1]} : vector<8x96xf32> to vector<8x32xf32>
      %50 = vector.extract_strided_slice %32 {offsets = [0, 64], sizes = [8, 32], strides = [1, 1]} : vector<8x96xf32> to vector<8x32xf32>
      %51 = arith.mulf %40, %50 : vector<8x32xf32>
      %52 = arith.addf %49, %51 : vector<8x32xf32>
      %53 = math.tanh %52 : vector<8x32xf32>
      %cst_35 = arith.constant 1.000000e+00 : f32
      %54 = vector.broadcast %cst_35 : f32 to vector<8x32xf32>
      %55 = arith.subf %54, %48 : vector<8x32xf32>
      %56 = arith.mulf %55, %53 : vector<8x32xf32>
      %57 = arith.mulf %48, %25 : vector<8x32xf32>
      %58 = arith.addf %56, %57 : vector<8x32xf32>
      %59 = arith.mulf %58, %24 : vector<8x32xf32>
      %60 = arith.index_cast %19 : i32 to index
      %c0_36 = arith.constant 0 : index
      %c0_37 = arith.constant 0 : index
      %61 = vector.load %arg10[%60, %c0_36, %c0_37] : memref<16x8x32xf32, #tpu.memory_space<vmem>>, vector<1x8x32xf32>
      %62 = vector.shape_cast %61 : vector<1x8x32xf32> to vector<8x32xf32>
      %63 = vector.shape_cast %59 : vector<8x32xf32> to vector<1x8x32xf32>
      tpu.vector_store %arg10[%60, %c0_36, %c0_37], %63 {strides = array<i32>} : memref<16x8x32xf32, #tpu.memory_space<vmem>>, vector<1x8x32xf32>,
      %64 = arith.mulf %58, %24 : vector<8x32xf32>
      %cst_38 = arith.constant 1.000000e+00 : f32
      %65 = vector.broadcast %cst_38 : f32 to vector<8x32xf32>
      %66 = arith.subf %65, %24 : vector<8x32xf32>
      %67 = arith.mulf %25, %66 : vector<8x32xf32>
      %68 = arith.addf %64, %67 : vector<8x32xf32>
      %c0_39 = arith.constant 0 : index
      %c0_40 = arith.constant 0 : index
      %69 = vector.load %arg14[%c0_39, %c0_40] : memref<8x32xf32, #tpu.memory_space<vmem>>, vector<8x32xf32>
      tpu.vector_store %arg14[%c0_39, %c0_40], %68 {strides = array<i32>} : memref<8x32xf32, #tpu.memory_space<vmem>>, vector<8x32xf32>,
      %c15_i32 = arith.constant 15 : i32
      %70 = arith.subi %c15_i32, %19 : i32
      %c8_i32_41 = arith.constant 8 : i32
      %71 = arith.muli %70, %c8_i32_41 : i32
      %72 = tpu.assume_multiple %71, 8 : i32
      %73 = arith.index_cast %70 : i32 to index
      %c0_42 = arith.constant 0 : index
      %c0_43 = arith.constant 0 : index
      %74 = vector.load %arg1[%73, %c0_42, %c0_43] : memref<16x8x32xf32, #tpu.memory_space<vmem>>, vector<1x8x32xf32>
      %75 = vector.shape_cast %74 : vector<1x8x32xf32> to vector<8x32xf32>
      %c0_44 = arith.constant 0 : index
      %c0_45 = arith.constant 0 : index
      %76 = vector.load %arg15[%c0_44, %c0_45] : memref<8x32xf32, #tpu.memory_space<vmem>>, vector<8x32xf32>
      %77 = arith.index_cast %72 : i32 to index
      %c0_46 = arith.constant 0 : index
      %78 = vector.load %arg13[%77, %c0_46] : memref<128x96xf32, #tpu.memory_space<vmem>>, vector<8x96xf32>
      %c0_47 = arith.constant 0 : index
      %c0_48 = arith.constant 0 : index
      %79 = vector.load %arg7[%c0_47, %c0_48] : memref<32x96xf32, #tpu.memory_space<vmem>>, vector<32x96xf32>
      %cst_49 = arith.constant dense<0.000000e+00> : vector<8x96xf32>
      %80 = tpu.matmul %76, %79, %cst_49 {dimension_numbers = #tpu.dot_dimension_numbers<[1], [0], [0], [1], [0, 0, 1, 1], [], []>} : vector<8x32xf32>, vector<32x96xf32>, vector<8x96xf32> -> vector<8x96xf32>
      %c0_50 = arith.constant 0 : index
      %c0_51 = arith.constant 0 : index
      %81 = vector.load %arg9[%c0_50, %c0_51] : memref<1x96xf32, #tpu.memory_space<vmem>>, vector<1x96xf32>
      %82 = vector.broadcast %81 : vector<1x96xf32> to vector<8x96xf32>
      %83 = arith.addf %80, %82 : vector<8x96xf32>
      %84 = vector.extract_strided_slice %78 {offsets = [0, 0], sizes = [8, 32], strides = [1, 1]} : vector<8x96xf32> to vector<8x32xf32>
      %85 = vector.extract_strided_slice %83 {offsets = [0, 0], sizes = [8, 32], strides = [1, 1]} : vector<8x96xf32> to vector<8x32xf32>
      %86 = arith.addf %84, %85 : vector<8x32xf32>
      %87 = arith.negf %86 : vector<8x32xf32>
      %88 = math.exp %87 : vector<8x32xf32>
      %cst_52 = arith.constant 1.000000e+00 : f32
      %89 = vector.broadcast %cst_52 : f32 to vector<8x32xf32>
      %90 = arith.addf %89, %88 : vector<8x32xf32>
      %91 = arith.divf %89, %90 : vector<8x32xf32>
      %92 = vector.extract_strided_slice %78 {offsets = [0, 32], sizes = [8, 32], strides = [1, 1]} : vector<8x96xf32> to vector<8x32xf32>
      %93 = vector.extract_strided_slice %83 {offsets = [0, 32], sizes = [8, 32], strides = [1, 1]} : vector<8x96xf32> to vector<8x32xf32>
      %94 = arith.addf %92, %93 : vector<8x32xf32>
      %95 = arith.negf %94 : vector<8x32xf32>
      %96 = math.exp %95 : vector<8x32xf32>
      %cst_53 = arith.constant 1.000000e+00 : f32
      %97 = vector.broadcast %cst_53 : f32 to vector<8x32xf32>
      %98 = arith.addf %97, %96 : vector<8x32xf32>
      %99 = arith.divf %97, %98 : vector<8x32xf32>
      %100 = vector.extract_strided_slice %78 {offsets = [0, 64], sizes = [8, 32], strides = [1, 1]} : vector<8x96xf32> to vector<8x32xf32>
      %101 = vector.extract_strided_slice %83 {offsets = [0, 64], sizes = [8, 32], strides = [1, 1]} : vector<8x96xf32> to vector<8x32xf32>
      %102 = arith.mulf %91, %101 : vector<8x32xf32>
      %103 = arith.addf %100, %102 : vector<8x32xf32>
      %104 = math.tanh %103 : vector<8x32xf32>
      %cst_54 = arith.constant 1.000000e+00 : f32
      %105 = vector.broadcast %cst_54 : f32 to vector<8x32xf32>
      %106 = arith.subf %105, %99 : vector<8x32xf32>
      %107 = arith.mulf %106, %104 : vector<8x32xf32>
      %108 = arith.mulf %99, %76 : vector<8x32xf32>
      %109 = arith.addf %107, %108 : vector<8x32xf32>
      %110 = arith.mulf %109, %75 : vector<8x32xf32>
      %111 = arith.index_cast %70 : i32 to index
      %c0_55 = arith.constant 0 : index
      %c0_56 = arith.constant 0 : index
      %112 = vector.load %arg11[%111, %c0_55, %c0_56] : memref<16x8x32xf32, #tpu.memory_space<vmem>>, vector<1x8x32xf32>
      %113 = vector.shape_cast %112 : vector<1x8x32xf32> to vector<8x32xf32>
      %114 = vector.shape_cast %110 : vector<8x32xf32> to vector<1x8x32xf32>
      tpu.vector_store %arg11[%111, %c0_55, %c0_56], %114 {strides = array<i32>} : memref<16x8x32xf32, #tpu.memory_space<vmem>>, vector<1x8x32xf32>,
      %115 = arith.mulf %109, %75 : vector<8x32xf32>
      %cst_57 = arith.constant 1.000000e+00 : f32
      %116 = vector.broadcast %cst_57 : f32 to vector<8x32xf32>
      %117 = arith.subf %116, %75 : vector<8x32xf32>
      %118 = arith.mulf %76, %117 : vector<8x32xf32>
      %119 = arith.addf %115, %118 : vector<8x32xf32>
      %c0_58 = arith.constant 0 : index
      %c0_59 = arith.constant 0 : index
      %120 = vector.load %arg15[%c0_58, %c0_59] : memref<8x32xf32, #tpu.memory_space<vmem>>, vector<8x32xf32>
      tpu.vector_store %arg15[%c0_58, %c0_59], %119 {strides = array<i32>} : memref<8x32xf32, #tpu.memory_space<vmem>>, vector<8x32xf32>,
    }
    %c16_i32_20 = arith.constant 16 : i32
    return
  }
}

module attributes {stable_mosaic.version = 11 : i64} {
  func.func @_gru_bidir_layer_kernel(%arg0: memref<128x64xf32, #tpu.memory_space<vmem>>, %arg1: memref<16x8x32xf32, #tpu.memory_space<vmem>>, %arg2: memref<64x96xf32, #tpu.memory_space<vmem>>, %arg3: memref<32x96xf32, #tpu.memory_space<vmem>>, %arg4: memref<1x96xf32, #tpu.memory_space<vmem>>, %arg5: memref<1x96xf32, #tpu.memory_space<vmem>>, %arg6: memref<64x96xf32, #tpu.memory_space<vmem>>, %arg7: memref<32x96xf32, #tpu.memory_space<vmem>>, %arg8: memref<1x96xf32, #tpu.memory_space<vmem>>, %arg9: memref<1x96xf32, #tpu.memory_space<vmem>>, %arg10: memref<16x8x32xf32, #tpu.memory_space<vmem>>, %arg11: memref<16x8x32xf32, #tpu.memory_space<vmem>>, %arg12: memref<128x96xf32, #tpu.memory_space<vmem>>, %arg13: memref<128x96xf32, #tpu.memory_space<vmem>>, %arg14: memref<8x32xf32, #tpu.memory_space<vmem>>, %arg15: memref<8x32xf32, #tpu.memory_space<vmem>>) attributes {dimension_semantics = [], scalar_prefetch = 0 : i64, scratch_operands = 4 : i64, tpu.core_type = #tpu.core_type<tc>} {
    %c0 = arith.constant 0 : index
    %c0_0 = arith.constant 0 : index
    %0 = vector.load %arg0[%c0, %c0_0] : memref<128x64xf32, #tpu.memory_space<vmem>>, vector<128x64xf32>
    %c0_1 = arith.constant 0 : index
    %c0_2 = arith.constant 0 : index
    %1 = vector.load %arg2[%c0_1, %c0_2] : memref<64x96xf32, #tpu.memory_space<vmem>>, vector<64x96xf32>
    %cst = arith.constant dense<0.000000e+00> : vector<128x96xf32>
    %2 = tpu.matmul %0, %1, %cst {dimension_numbers = #tpu.dot_dimension_numbers<[1], [0], [0], [1], [0, 0, 1, 1], [], []>} : vector<128x64xf32>, vector<64x96xf32>, vector<128x96xf32> -> vector<128x96xf32>
    %c0_3 = arith.constant 0 : index
    %c0_4 = arith.constant 0 : index
    %3 = vector.load %arg4[%c0_3, %c0_4] : memref<1x96xf32, #tpu.memory_space<vmem>>, vector<1x96xf32>
    %4 = vector.broadcast %3 : vector<1x96xf32> to vector<128x96xf32>
    %5 = arith.addf %2, %4 : vector<128x96xf32>
    %c0_5 = arith.constant 0 : index
    %c0_6 = arith.constant 0 : index
    %6 = vector.load %arg12[%c0_5, %c0_6] : memref<128x96xf32, #tpu.memory_space<vmem>>, vector<128x96xf32>
    tpu.vector_store %arg12[%c0_5, %c0_6], %5 {strides = array<i32>} : memref<128x96xf32, #tpu.memory_space<vmem>>, vector<128x96xf32>,
    %c0_7 = arith.constant 0 : index
    %c0_8 = arith.constant 0 : index
    %7 = vector.load %arg6[%c0_7, %c0_8] : memref<64x96xf32, #tpu.memory_space<vmem>>, vector<64x96xf32>
    %cst_9 = arith.constant dense<0.000000e+00> : vector<128x96xf32>
    %8 = tpu.matmul %0, %7, %cst_9 {dimension_numbers = #tpu.dot_dimension_numbers<[1], [0], [0], [1], [0, 0, 1, 1], [], []>} : vector<128x64xf32>, vector<64x96xf32>, vector<128x96xf32> -> vector<128x96xf32>
    %c0_10 = arith.constant 0 : index
    %c0_11 = arith.constant 0 : index
    %9 = vector.load %arg8[%c0_10, %c0_11] : memref<1x96xf32, #tpu.memory_space<vmem>>, vector<1x96xf32>
    %10 = vector.broadcast %9 : vector<1x96xf32> to vector<128x96xf32>
    %11 = arith.addf %8, %10 : vector<128x96xf32>
    %c0_12 = arith.constant 0 : index
    %c0_13 = arith.constant 0 : index
    %12 = vector.load %arg13[%c0_12, %c0_13] : memref<128x96xf32, #tpu.memory_space<vmem>>, vector<128x96xf32>
    tpu.vector_store %arg13[%c0_12, %c0_13], %11 {strides = array<i32>} : memref<128x96xf32, #tpu.memory_space<vmem>>, vector<128x96xf32>,
    %cst_14 = arith.constant 0.000000e+00 : f32
    %13 = vector.broadcast %cst_14 : f32 to vector<8x32xf32>
    %c0_15 = arith.constant 0 : index
    %c0_16 = arith.constant 0 : index
    %14 = vector.load %arg14[%c0_15, %c0_16] : memref<8x32xf32, #tpu.memory_space<vmem>>, vector<8x32xf32>
    tpu.vector_store %arg14[%c0_15, %c0_16], %13 {strides = array<i32>} : memref<8x32xf32, #tpu.memory_space<vmem>>, vector<8x32xf32>,
    %cst_17 = arith.constant 0.000000e+00 : f32
    %15 = vector.broadcast %cst_17 : f32 to vector<8x32xf32>
    %c0_18 = arith.constant 0 : index
    %c0_19 = arith.constant 0 : index
    %16 = vector.load %arg15[%c0_18, %c0_19] : memref<8x32xf32, #tpu.memory_space<vmem>>, vector<8x32xf32>
    tpu.vector_store %arg15[%c0_18, %c0_19], %15 {strides = array<i32>} : memref<8x32xf32, #tpu.memory_space<vmem>>, vector<8x32xf32>,
    %c0_i32 = arith.constant 0 : i32
    %c16_i32 = arith.constant 16 : i32
    %17 = arith.addi %c0_i32, %c16_i32 : i32
    %c1_i32 = arith.constant 1 : i32
    scf.for %arg16 = %c0_i32 to %17 step %c1_i32  : i32 {
      %c1_i32_21 = arith.constant 1 : i32
      %18 = arith.muli %arg16, %c1_i32_21 : i32
      %c0_i32_22 = arith.constant 0 : i32
      %19 = arith.addi %c0_i32_22, %18 : i32
      %c8_i32 = arith.constant 8 : i32
      %20 = arith.muli %19, %c8_i32 : i32
      %21 = tpu.assume_multiple %20, 8 : i32
      %22 = arith.index_cast %19 : i32 to index
      %c0_23 = arith.constant 0 : index
      %c0_24 = arith.constant 0 : index
      %23 = vector.load %arg1[%22, %c0_23, %c0_24] : memref<16x8x32xf32, #tpu.memory_space<vmem>>, vector<1x8x32xf32>
      %24 = vector.shape_cast %23 : vector<1x8x32xf32> to vector<8x32xf32>
      %c0_25 = arith.constant 0 : index
      %c0_26 = arith.constant 0 : index
      %25 = vector.load %arg14[%c0_25, %c0_26] : memref<8x32xf32, #tpu.memory_space<vmem>>, vector<8x32xf32>
      %26 = arith.index_cast %21 : i32 to index
      %c0_27 = arith.constant 0 : index
      %27 = vector.load %arg12[%26, %c0_27] : memref<128x96xf32, #tpu.memory_space<vmem>>, vector<8x96xf32>
      %c0_28 = arith.constant 0 : index
      %c0_29 = arith.constant 0 : index
      %28 = vector.load %arg3[%c0_28, %c0_29] : memref<32x96xf32, #tpu.memory_space<vmem>>, vector<32x96xf32>
      %cst_30 = arith.constant dense<0.000000e+00> : vector<8x96xf32>
      %29 = tpu.matmul %25, %28, %cst_30 {dimension_numbers = #tpu.dot_dimension_numbers<[1], [0], [0], [1], [0, 0, 1, 1], [], []>} : vector<8x32xf32>, vector<32x96xf32>, vector<8x96xf32> -> vector<8x96xf32>
      %c0_31 = arith.constant 0 : index
      %c0_32 = arith.constant 0 : index
      %30 = vector.load %arg5[%c0_31, %c0_32] : memref<1x96xf32, #tpu.memory_space<vmem>>, vector<1x96xf32>
      %31 = vector.broadcast %30 : vector<1x96xf32> to vector<8x96xf32>
      %32 = arith.addf %29, %31 : vector<8x96xf32>
      %33 = vector.extract_strided_slice %27 {offsets = [0, 0], sizes = [8, 32], strides = [1, 1]} : vector<8x96xf32> to vector<8x32xf32>
      %34 = vector.extract_strided_slice %32 {offsets = [0, 0], sizes = [8, 32], strides = [1, 1]} : vector<8x96xf32> to vector<8x32xf32>
      %35 = arith.addf %33, %34 : vector<8x32xf32>
      %36 = arith.negf %35 : vector<8x32xf32>
      %37 = math.exp %36 : vector<8x32xf32>
      %cst_33 = arith.constant 1.000000e+00 : f32
      %38 = vector.broadcast %cst_33 : f32 to vector<8x32xf32>
      %39 = arith.addf %38, %37 : vector<8x32xf32>
      %40 = arith.divf %38, %39 : vector<8x32xf32>
      %41 = vector.extract_strided_slice %27 {offsets = [0, 32], sizes = [8, 32], strides = [1, 1]} : vector<8x96xf32> to vector<8x32xf32>
      %42 = vector.extract_strided_slice %32 {offsets = [0, 32], sizes = [8, 32], strides = [1, 1]} : vector<8x96xf32> to vector<8x32xf32>
      %43 = arith.addf %41, %42 : vector<8x32xf32>
      %44 = arith.negf %43 : vector<8x32xf32>
      %45 = math.exp %44 : vector<8x32xf32>
      %cst_34 = arith.constant 1.000000e+00 : f32
      %46 = vector.broadcast %cst_34 : f32 to vector<8x32xf32>
      %47 = arith.addf %46, %45 : vector<8x32xf32>
      %48 = arith.divf %46, %47 : vector<8x32xf32>
      %49 = vector.extract_strided_slice %27 {offsets = [0, 64], sizes = [8, 32], strides = [1, 1]} : vector<8x96xf32> to vector<8x32xf32>
      %50 = vector.extract_strided_slice %32 {offsets = [0, 64], sizes = [8, 32], strides = [1, 1]} : vector<8x96xf32> to vector<8x32xf32>
      %51 = arith.mulf %40, %50 : vector<8x32xf32>
      %52 = arith.addf %49, %51 : vector<8x32xf32>
      %53 = math.tanh %52 : vector<8x32xf32>
      %cst_35 = arith.constant 1.000000e+00 : f32
      %54 = vector.broadcast %cst_35 : f32 to vector<8x32xf32>
      %55 = arith.subf %54, %48 : vector<8x32xf32>
      %56 = arith.mulf %55, %53 : vector<8x32xf32>
      %57 = arith.mulf %48, %25 : vector<8x32xf32>
      %58 = arith.addf %56, %57 : vector<8x32xf32>
      %59 = arith.mulf %58, %24 : vector<8x32xf32>
      %60 = arith.index_cast %19 : i32 to index
      %c0_36 = arith.constant 0 : index
      %c0_37 = arith.constant 0 : index
      %61 = vector.load %arg10[%60, %c0_36, %c0_37] : memref<16x8x32xf32, #tpu.memory_space<vmem>>, vector<1x8x32xf32>
      %62 = vector.shape_cast %61 : vector<1x8x32xf32> to vector<8x32xf32>
      %63 = vector.shape_cast %59 : vector<8x32xf32> to vector<1x8x32xf32>
      tpu.vector_store %arg10[%60, %c0_36, %c0_37], %63 {strides = array<i32>} : memref<16x8x32xf32, #tpu.memory_space<vmem>>, vector<1x8x32xf32>,
      %64 = arith.mulf %58, %24 : vector<8x32xf32>
      %cst_38 = arith.constant 1.000000e+00 : f32
      %65 = vector.broadcast %cst_38 : f32 to vector<8x32xf32>
      %66 = arith.subf %65, %24 : vector<8x32xf32>
      %67 = arith.mulf %25, %66 : vector<8x32xf32>
      %68 = arith.addf %64, %67 : vector<8x32xf32>
      %c0_39 = arith.constant 0 : index
      %c0_40 = arith.constant 0 : index
      %69 = vector.load %arg14[%c0_39, %c0_40] : memref<8x32xf32, #tpu.memory_space<vmem>>, vector<8x32xf32>
      tpu.vector_store %arg14[%c0_39, %c0_40], %68 {strides = array<i32>} : memref<8x32xf32, #tpu.memory_space<vmem>>, vector<8x32xf32>,
      %c15_i32 = arith.constant 15 : i32
      %70 = arith.subi %c15_i32, %19 : i32
      %c8_i32_41 = arith.constant 8 : i32
      %71 = arith.muli %70, %c8_i32_41 : i32
      %72 = tpu.assume_multiple %71, 8 : i32
      %73 = arith.index_cast %70 : i32 to index
      %c0_42 = arith.constant 0 : index
      %c0_43 = arith.constant 0 : index
      %74 = vector.load %arg1[%73, %c0_42, %c0_43] : memref<16x8x32xf32, #tpu.memory_space<vmem>>, vector<1x8x32xf32>
      %75 = vector.shape_cast %74 : vector<1x8x32xf32> to vector<8x32xf32>
      %c0_44 = arith.constant 0 : index
      %c0_45 = arith.constant 0 : index
      %76 = vector.load %arg15[%c0_44, %c0_45] : memref<8x32xf32, #tpu.memory_space<vmem>>, vector<8x32xf32>
      %77 = arith.index_cast %72 : i32 to index
      %c0_46 = arith.constant 0 : index
      %78 = vector.load %arg13[%77, %c0_46] : memref<128x96xf32, #tpu.memory_space<vmem>>, vector<8x96xf32>
      %c0_47 = arith.constant 0 : index
      %c0_48 = arith.constant 0 : index
      %79 = vector.load %arg7[%c0_47, %c0_48] : memref<32x96xf32, #tpu.memory_space<vmem>>, vector<32x96xf32>
      %cst_49 = arith.constant dense<0.000000e+00> : vector<8x96xf32>
      %80 = tpu.matmul %76, %79, %cst_49 {dimension_numbers = #tpu.dot_dimension_numbers<[1], [0], [0], [1], [0, 0, 1, 1], [], []>} : vector<8x32xf32>, vector<32x96xf32>, vector<8x96xf32> -> vector<8x96xf32>
      %c0_50 = arith.constant 0 : index
      %c0_51 = arith.constant 0 : index
      %81 = vector.load %arg9[%c0_50, %c0_51] : memref<1x96xf32, #tpu.memory_space<vmem>>, vector<1x96xf32>
      %82 = vector.broadcast %81 : vector<1x96xf32> to vector<8x96xf32>
      %83 = arith.addf %80, %82 : vector<8x96xf32>
      %84 = vector.extract_strided_slice %78 {offsets = [0, 0], sizes = [8, 32], strides = [1, 1]} : vector<8x96xf32> to vector<8x32xf32>
      %85 = vector.extract_strided_slice %83 {offsets = [0, 0], sizes = [8, 32], strides = [1, 1]} : vector<8x96xf32> to vector<8x32xf32>
      %86 = arith.addf %84, %85 : vector<8x32xf32>
      %87 = arith.negf %86 : vector<8x32xf32>
      %88 = math.exp %87 : vector<8x32xf32>
      %cst_52 = arith.constant 1.000000e+00 : f32
      %89 = vector.broadcast %cst_52 : f32 to vector<8x32xf32>
      %90 = arith.addf %89, %88 : vector<8x32xf32>
      %91 = arith.divf %89, %90 : vector<8x32xf32>
      %92 = vector.extract_strided_slice %78 {offsets = [0, 32], sizes = [8, 32], strides = [1, 1]} : vector<8x96xf32> to vector<8x32xf32>
      %93 = vector.extract_strided_slice %83 {offsets = [0, 32], sizes = [8, 32], strides = [1, 1]} : vector<8x96xf32> to vector<8x32xf32>
      %94 = arith.addf %92, %93 : vector<8x32xf32>
      %95 = arith.negf %94 : vector<8x32xf32>
      %96 = math.exp %95 : vector<8x32xf32>
      %cst_53 = arith.constant 1.000000e+00 : f32
      %97 = vector.broadcast %cst_53 : f32 to vector<8x32xf32>
      %98 = arith.addf %97, %96 : vector<8x32xf32>
      %99 = arith.divf %97, %98 : vector<8x32xf32>
      %100 = vector.extract_strided_slice %78 {offsets = [0, 64], sizes = [8, 32], strides = [1, 1]} : vector<8x96xf32> to vector<8x32xf32>
      %101 = vector.extract_strided_slice %83 {offsets = [0, 64], sizes = [8, 32], strides = [1, 1]} : vector<8x96xf32> to vector<8x32xf32>
      %102 = arith.mulf %91, %101 : vector<8x32xf32>
      %103 = arith.addf %100, %102 : vector<8x32xf32>
      %104 = math.tanh %103 : vector<8x32xf32>
      %cst_54 = arith.constant 1.000000e+00 : f32
      %105 = vector.broadcast %cst_54 : f32 to vector<8x32xf32>
      %106 = arith.subf %105, %99 : vector<8x32xf32>
      %107 = arith.mulf %106, %104 : vector<8x32xf32>
      %108 = arith.mulf %99, %76 : vector<8x32xf32>
      %109 = arith.addf %107, %108 : vector<8x32xf32>
      %110 = arith.mulf %109, %75 : vector<8x32xf32>
      %111 = arith.index_cast %70 : i32 to index
      %c0_55 = arith.constant 0 : index
      %c0_56 = arith.constant 0 : index
      %112 = vector.load %arg11[%111, %c0_55, %c0_56] : memref<16x8x32xf32, #tpu.memory_space<vmem>>, vector<1x8x32xf32>
      %113 = vector.shape_cast %112 : vector<1x8x32xf32> to vector<8x32xf32>
      %114 = vector.shape_cast %110 : vector<8x32xf32> to vector<1x8x32xf32>
      tpu.vector_store %arg11[%111, %c0_55, %c0_56], %114 {strides = array<i32>} : memref<16x8x32xf32, #tpu.memory_space<vmem>>, vector<1x8x32xf32>,
      %115 = arith.mulf %109, %75 : vector<8x32xf32>
      %cst_57 = arith.constant 1.000000e+00 : f32
      %116 = vector.broadcast %cst_57 : f32 to vector<8x32xf32>
      %117 = arith.subf %116, %75 : vector<8x32xf32>
      %118 = arith.mulf %76, %117 : vector<8x32xf32>
      %119 = arith.addf %115, %118 : vector<8x32xf32>
      %c0_58 = arith.constant 0 : index
      %c0_59 = arith.constant 0 : index
      %120 = vector.load %arg15[%c0_58, %c0_59] : memref<8x32xf32, #tpu.memory_space<vmem>>, vector<8x32xf32>
      tpu.vector_store %arg15[%c0_58, %c0_59], %119 {strides = array<i32>} : memref<8x32xf32, #tpu.memory_space<vmem>>, vector<8x32xf32>,
    }
    %c16_i32_20 = arith.constant 16 : i32
    return
  }
}

</mosaic_0001>

<llo_original>
// kernel: encoder_forward.3
$region0: #{encoder_forward.3}
  #allocation0 [shape = 'u32[]', space=smem, size = 0x4, offset = 0x4, fixed_abs, tag = 'smem constant byte address 0x4 - core index']
  #allocation1 [shape = 'u32[144,128]{1,0:T(1,128)}', space=vmem, size = 0x12000, scoped, tag = 'internal scratch']
  #allocation2 [shape = 'f32[128,96]{1,0:T(8,128)}', space=vmem, size = 0x10000, scoped, tag = 'scratch operand']
  #allocation3 [shape = 'f32[128,96]{1,0:T(8,128)}', space=vmem, size = 0x10000, scoped, tag = 'scratch operand']
  #allocation4 [shape = 'f32[8,32]{1,0:T(8,128)}', space=vmem, size = 0x1000, scoped, tag = 'scratch operand']
  #allocation5 [shape = 'f32[8,32]{1,0:T(8,128)}', space=vmem, size = 0x1000, scoped, tag = 'scratch operand']
  %s0 = inlined_call_operand.vmem [shape: f32[128,64], index: 0, kind: input, shape index: {}]
  %s1 = inlined_call_operand.vmem [shape: f32[16,8,32], index: 1, kind: input, shape index: {}]
  %s2 = inlined_call_operand.vmem [shape: f32[64,96], index: 2, kind: input, shape index: {}]
  %s3 = inlined_call_operand.vmem [shape: f32[32,96], index: 3, kind: input, shape index: {}]
  %s4 = inlined_call_operand.vmem [shape: f32[1,96], index: 4, kind: input, shape index: {}]
  %s5 = inlined_call_operand.vmem [shape: f32[1,96], index: 5, kind: input, shape index: {}]
  %s6 = inlined_call_operand.vmem [shape: f32[64,96], index: 6, kind: input, shape index: {}]
  %s7 = inlined_call_operand.vmem [shape: f32[32,96], index: 7, kind: input, shape index: {}]
  %s8 = inlined_call_operand.vmem [shape: f32[1,96], index: 8, kind: input, shape index: {}]
  %s9 = inlined_call_operand.vmem [shape: f32[1,96], index: 9, kind: input, shape index: {}]
  %s10 = inlined_call_operand.vmem [shape: f32[16,8,32], index: 10, kind: output, shape index: {0}]
  %s11 = inlined_call_operand.vmem [shape: f32[16,8,32], index: 11, kind: output, shape index: {1}]
  %12 = xla_tuple %s10, %s11
  %s13 = sld [smem:[#allocation0]]
  $region65: #{encoder_forward.3} parent=0
    _
  %s15 = ssub.s32 1, %s13
  %s16 = scalar_select 0, %s15, %s13
  // Predicated region
  $region2: #{encoder_forward.3} parent=0 // pred_check
    _
  $region3: #{encoder_forward.3} parent=0 // pred_check_branch
    %18 = sbr.rel (0) target = $region5
  $region4: #{encoder_forward.3} parent=0 // pred_region
    _
  $region5: #{encoder_forward.3} parent=0 // pred_fallthru
    _
  // Predicated region
  $region6: #{encoder_forward.3} parent=0 // pred_check
    _
  $region7: #{encoder_forward.3} parent=0 // pred_check_branch
    %20 = sbr.rel (0) target = $region9
  $region8: #{encoder_forward.3} parent=0 // pred_region
    _
  $region9: #{encoder_forward.3} parent=0 // pred_fallthru
    _
  // Predicated region
  $region10: #{encoder_forward.3} parent=0 // pred_check
    _
  $region11: #{encoder_forward.3} parent=0 // pred_check_branch
    %22 = sbr.rel (0) target = $region13
  $region12: #{encoder_forward.3} parent=0 // pred_region
    _
  $region13: #{encoder_forward.3} parent=0 // pred_fallthru
    _
  // Predicated region
  $region14: #{encoder_forward.3} parent=0 // pred_check
    _
  $region15: #{encoder_forward.3} parent=0 // pred_check_branch
    %24 = sbr.rel (0) target = $region17
  $region16: #{encoder_forward.3} parent=0 // pred_region
    _
  $region17: #{encoder_forward.3} parent=0 // pred_fallthru
    _
  // Predicated region
  $region18: #{encoder_forward.3} parent=0 // pred_check
    _
  $region19: #{encoder_forward.3} parent=0 // pred_check_branch
    %26 = sbr.rel (0) target = $region21
  $region20: #{encoder_forward.3} parent=0 // pred_region
    _
  $region21: #{encoder_forward.3} parent=0 // pred_fallthru
    _
  // Predicated region
  $region22: #{encoder_forward.3} parent=0 // pred_check
    _
  $region23: #{encoder_forward.3} parent=0 // pred_check_branch
    %28 = sbr.rel (0) target = $region25
  $region24: #{encoder_forward.3} parent=0 // pred_region
    _
  $region25: #{encoder_forward.3} parent=0 // pred_fallthru
    _
  // Predicated region
  $region26: #{encoder_forward.3} parent=0 // pred_check
    _
  $region27: #{encoder_forward.3} parent=0 // pred_check_branch
    %30 = sbr.rel (0) target = $region29
  $region28: #{encoder_forward.3} parent=0 // pred_region
    _
  $region29: #{encoder_forward.3} parent=0 // pred_fallthru
    _
  // Predicated region
  $region30: #{encoder_forward.3} parent=0 // pred_check
    _
  $region31: #{encoder_forward.3} parent=0 // pred_check_branch
    %32 = sbr.rel (0) target = $region33
  $region32: #{encoder_forward.3} parent=0 // pred_region
    _
  $region33: #{encoder_forward.3} parent=0 // pred_fallthru
    _
  // Predicated region
  $region34: #{encoder_forward.3} parent=0 // pred_check
    _
  $region35: #{encoder_forward.3} parent=0 // pred_check_branch
    %34 = sbr.rel (0) target = $region37
  $region36: #{encoder_forward.3} parent=0 // pred_region
    _
  $region37: #{encoder_forward.3} parent=0 // pred_fallthru
    _
  // Predicated region
  $region38: #{encoder_forward.3} parent=0 // pred_check
    _
  $region39: #{encoder_forward.3} parent=0 // pred_check_branch
    %36 = sbr.rel (0) target = $region41
  $region40: #{encoder_forward.3} parent=0 // pred_region
    _
  $region41: #{encoder_forward.3} parent=0 // pred_fallthru
    _
  %v37 = vld [vmem:[%s0] sm:$0xff]
  %v38 = vld [vmem:[%s0 + $0x8] sm:$0xff]
  %v39 = vld [vmem:[%s0 + $0x10] sm:$0xff]
  %v40 = vld [vmem:[%s0 + $0x18] sm:$0xff]
  %v41 = vld [vmem:[%s0 + $0x20] sm:$0xff]
  %v42 = vld [vmem:[%s0 + $0x28] sm:$0xff]
  %v43 = vld [vmem:[%s0 + $0x30] sm:$0xff]
  %v44 = vld [vmem:[%s0 + $0x38] sm:$0xff]
  %v45 = vld [vmem:[%s0 + $0x40] sm:$0xff]
  %v46 = vld [vmem:[%s0 + $0x48] sm:$0xff]
  %v47 = vld [vmem:[%s0 + $0x50] sm:$0xff]
  %v48 = vld [vmem:[%s0 + $0x58] sm:$0xff]
  %v49 = vld [vmem:[%s0 + $0x60] sm:$0xff]
  %v50 = vld [vmem:[%s0 + $0x68] sm:$0xff]
  %v51 = vld [vmem:[%s0 + $0x70] sm:$0xff]
  %v52 = vld [vmem:[%s0 + $0x78] sm:$0xff]
  %v53 = vld [vmem:[%s2] sm:$0xff]
  %v54 = vld [vmem:[%s2 + $0x8] sm:$0xff]
  %v55 = vld [vmem:[%s2 + $0x10] sm:$0xff]
  %v56 = vld [vmem:[%s2 + $0x18] sm:$0xff]
  %v57 = vld [vmem:[%s2 + $0x20] sm:$0xff]
  %v58 = vld [vmem:[%s2 + $0x28] sm:$0xff]
  %v59 = vld [vmem:[%s2 + $0x30] sm:$0xff]
  %v60 = vld [vmem:[%s2 + $0x38] sm:$0xff]
  %v61 = vld [vmem:[%s4] sm:$0x1]
  %v63 = vlaneseq
  %v64 = vshrl.u32 %v63, 7
  %v65 = vsub.s32 0, %v64
  %v66 = vrot.slane %v61, %v65
  %vm68 = vcmask 523264
  %v70 = vsel %vm68, %v37, 0
  %v73 = vsel %vm68, %v38, 0
  %v76 = vsel %vm68, %v39, 0
  %v79 = vsel %vm68, %v40, 0
  %v82 = vsel %vm68, %v41, 0
  %v85 = vsel %vm68, %v42, 0
  %v88 = vsel %vm68, %v43, 0
  %v91 = vsel %vm68, %v44, 0
  %v94 = vsel %vm68, %v45, 0
  %v97 = vsel %vm68, %v46, 0
  %v100 = vsel %vm68, %v47, 0
  %v103 = vsel %vm68, %v48, 0
  %v106 = vsel %vm68, %v49, 0
  %v109 = vsel %vm68, %v50, 0
  %v112 = vsel %vm68, %v51, 0
  %v115 = vsel %vm68, %v52, 0
  %117 = vmatprep.subr.mxu0 0.0
  %118 = vmatpush1.msra.mxu0 %v53
  %119 = vmatprep.subr.mxu0 0.0
  %120 = vmatpush1.msra.mxu0 %v54
  %121 = vmatprep.subr.mxu0 0.0
  %122 = vmatpush1.msra.mxu0 %v55
  %123 = vmatprep.subr.mxu0 0.0
  %124 = vmatpush1.msra.mxu0 %v56
  %125 = vmatprep.subr.mxu0 0.0
  %126 = vmatpush1.msra.mxu0 %v57
  %127 = vmatprep.subr.mxu0 0.0
  %128 = vmatpush1.msra.mxu0 %v58
  %129 = vmatprep.subr.mxu0 0.0
  %130 = vmatpush1.msra.mxu0 %v59
  %131 = vmatprep.subr.mxu0 0.0
  %132 = vmatpush1.msra.mxu0 %v60
  %133 = vmatprep.subr.mxu0 0.0
  %134 = vmatpush1.msra.mxu0 0.0
  %135 = vmatprep.subr.mxu0 0.0
  %136 = vmatpush1.msra.mxu0 0.0
  %137 = vmatprep.subr.mxu0 0.0
  %138 = vmatpush1.msra.mxu0 0.0
  %139 = vmatprep.subr.mxu0 0.0
  %140 = vmatpush1.msra.mxu0 0.0
  %141 = vmatprep.subr.mxu0 0.0
  %142 = vmatpush1.msra.mxu0 0.0
  %143 = vmatprep.subr.mxu0 0.0
  %144 = vmatpush1.msra.mxu0 0.0
  %145 = vmatprep.subr.mxu0 0.0
  %146 = vmatpush1.msra.mxu0 0.0
  %147 = vmatprep.subr.mxu0 0.0
  %148 = vmatpush1.msra.mxu0 0.0
  %149 = vmatprep.subr.mxu0 0.0
  %150 = vmatpush1.msra.mxu0 0.0
  %151 = vmatprep.subr.mxu0 0.0
  %152 = vmatpush1.msra.mxu0 0.0
  %153 = vmatprep.subr.mxu0 0.0
  %154 = vmatpush1.msra.mxu0 0.0
  %155 = vmatprep.subr.mxu0 0.0
  %156 = vmatpush1.msra.mxu0 0.0
  %157 = vmatprep.subr.mxu0 0.0
  %158 = vmatpush1.msra.mxu0 0.0
  %159 = vmatprep.subr.mxu0 0.0
  %160 = vmatpush1.msra.mxu0 0.0
  %161 = vmatprep.subr.mxu0 0.0
  %162 = vmatpush1.msra.mxu0 0.0
  %163 = vmatprep.subr.mxu0 0.0
  %164 = vmatpush1.msra.mxu0 0.0
  %165 = vmatprep.subr.mxu0 0.0
  %166 = vmatpush1.msra.mxu0 0.0
  %167 = vmatprep.subr.mxu0 0.0
  %168 = vmatpush1.msra.mxu0 0.0
  %169 = vmatprep.subr.mxu0 0.0
  %170 = vmatpush1.msra.mxu0 0.0
  %171 = vmatprep.subr.mxu0 0.0
  %172 = vmatpush1.msra.mxu0 0.0
  %173 = vmatprep.subr.mxu0 0.0
  %174 = vmatpush1.msra.mxu0 0.0
  %175 = vmatprep.subr.mxu0 0.0
  %176 = vmatpush1.msra.mxu0 0.0
  %177 = vmatprep.subr.mxu0 0.0
  %178 = vmatpush1.msra.mxu0 0.0
  %179 = vmatprep.subr.mxu0 0.0
  %180 = vmatpush1.msra.mxu0 0.0
  %181 = vmatprep.mubr.f32.mxu0 0.0
  %182 = vmatmul.mubr.f32.gmra.mrb[0].mxu0 %v70
  %v183 = vpop.f32.mrb[0].mxu0
  %v184 = vadd.f32 %v66, %v183
  %v185 = vpop.f32.mrb[0].mxu0
  %186 = vmatprep.mubr.f32.mxu0 0.0
  %187 = vmatmul.mubr.f32.gmra.mrb[0].mxu0 %v73
  %v188 = vpop.f32.mrb[0].mxu0
  %v189 = vadd.f32 %v66, %v188
  %v190 = vpop.f32.mrb[0].mxu0
  %191 = vmatprep.mubr.f32.mxu0 0.0
  %192 = vmatmul.mubr.f32.gmra.mrb[0].mxu0 %v76
  %v193 = vpop.f32.mrb[0].mxu0
  %v194 = vadd.f32 %v66, %v193
  %v195 = vpop.f32.mrb[0].mxu0
  %196 = vmatprep.mubr.f32.mxu0 0.0
  %197 = vmatmul.mubr.f32.gmra.mrb[0].mxu0 %v79
  %v198 = vpop.f32.mrb[0].mxu0
  %v199 = vadd.f32 %v66, %v198
  %v200 = vpop.f32.mrb[0].mxu0
  %201 = vmatprep.mubr.f32.mxu0 0.0
  %202 = vmatmul.mubr.f32.gmra.mrb[0].mxu0 %v82
  %v203 = vpop.f32.mrb[0].mxu0
  %v204 = vadd.f32 %v66, %v203
  %v205 = vpop.f32.mrb[0].mxu0
  %206 = vmatprep.mubr.f32.mxu0 0.0
  %207 = vmatmul.mubr.f32.gmra.mrb[0].mxu0 %v85
  %v208 = vpop.f32.mrb[0].mxu0
  %v209 = vadd.f32 %v66, %v208
  %v210 = vpop.f32.mrb[0].mxu0
  %211 = vmatprep.mubr.f32.mxu0 0.0
  %212 = vmatmul.mubr.f32.gmra.mrb[0].mxu0 %v88
  %v213 = vpop.f32.mrb[0].mxu0
  %v214 = vadd.f32 %v66, %v213
  %v215 = vpop.f32.mrb[0].mxu0
  %216 = vmatprep.mubr.f32.mxu0 0.0
  %217 = vmatmul.mubr.f32.gmra.mrb[0].mxu0 %v91
  %v218 = vpop.f32.mrb[0].mxu0
  %v219 = vadd.f32 %v66, %v218
  %v220 = vpop.f32.mrb[0].mxu0
  %221 = vmatprep.mubr.f32.mxu0 0.0
  %222 = vmatmul.mubr.f32.gmra.mrb[0].mxu0 %v94
  %v223 = vpop.f32.mrb[0].mxu0
  %v224 = vadd.f32 %v66, %v223
  %v225 = vpop.f32.mrb[0].mxu0
  %226 = vmatprep.mubr.f32.mxu0 0.0
  %227 = vmatmul.mubr.f32.gmra.mrb[0].mxu0 %v97
  %v228 = vpop.f32.mrb[0].mxu0
  %v229 = vadd.f32 %v66, %v228
  %v230 = vpop.f32.mrb[0].mxu0
  %231 = vmatprep.mubr.f32.mxu0 0.0
  %232 = vmatmul.mubr.f32.gmra.mrb[0].mxu0 %v100
  %v233 = vpop.f32.mrb[0].mxu0
  %v234 = vadd.f32 %v66, %v233
  %v235 = vpop.f32.mrb[0].mxu0
  %236 = vmatprep.mubr.f32.mxu0 0.0
  %237 = vmatmul.mubr.f32.gmra.mrb[0].mxu0 %v103
  %v238 = vpop.f32.mrb[0].mxu0
  %v239 = vadd.f32 %v66, %v238
  %v240 = vpop.f32.mrb[0].mxu0
  %241 = vmatprep.mubr.f32.mxu0 0.0
  %242 = vmatmul.mubr.f32.gmra.mrb[0].mxu0 %v106
  %v243 = vpop.f32.mrb[0].mxu0
  %v244 = vadd.f32 %v66, %v243
  %v245 = vpop.f32.mrb[0].mxu0
  %246 = vmatprep.mubr.f32.mxu0 0.0
  %247 = vmatmul.mubr.f32.gmra.mrb[0].mxu0 %v109
  %v248 = vpop.f32.mrb[0].mxu0
  %v249 = vadd.f32 %v66, %v248
  %v250 = vpop.f32.mrb[0].mxu0
  %251 = vmatprep.mubr.f32.mxu0 0.0
  %252 = vmatmul.mubr.f32.gmra.mrb[0].mxu0 %v112
  %v253 = vpop.f32.mrb[0].mxu0
  %v254 = vadd.f32 %v66, %v253
  %v255 = vpop.f32.mrb[0].mxu0
  %256 = vmatprep.mubr.f32.mxu0 0.0
  %257 = vmatmul.mubr.f32.gmra.mrb[0].mxu0 %v115
  %v258 = vpop.f32.mrb[0].mxu0
  %v259 = vadd.f32 %v66, %v258
  %v260 = vpop.f32.mrb[0].mxu0
  %261 = vdwg.mxu0
  %vm262 = vcmask 785408
  %263 = vst.msk [vmem:[#allocation2] sm:$0xff] %vm262, %v184
  %264 = vst.msk [vmem:[#allocation2 + $0x8] sm:$0xff] %vm262, %v189
  %265 = vst.msk [vmem:[#allocation2 + $0x10] sm:$0xff] %vm262, %v194
  %266 = vst.msk [vmem:[#allocation2 + $0x18] sm:$0xff] %vm262, %v199
  %267 = vst.msk [vmem:[#allocation2 + $0x20] sm:$0xff] %vm262, %v204
  %268 = vst.msk [vmem:[#allocation2 + $0x28] sm:$0xff] %vm262, %v209
  %269 = vst.msk [vmem:[#allocation2 + $0x30] sm:$0xff] %vm262, %v214
  %270 = vst.msk [vmem:[#allocation2 + $0x38] sm:$0xff] %vm262, %v219
  %271 = vst.msk [vmem:[#allocation2 + $0x40] sm:$0xff] %vm262, %v224
  %272 = vst.msk [vmem:[#allocation2 + $0x48] sm:$0xff] %vm262, %v229
  %273 = vst.msk [vmem:[#allocation2 + $0x50] sm:$0xff] %vm262, %v234
  %274 = vst.msk [vmem:[#allocation2 + $0x58] sm:$0xff] %vm262, %v239
  %275 = vst.msk [vmem:[#allocation2 + $0x60] sm:$0xff] %vm262, %v244
  %276 = vst.msk [vmem:[#allocation2 + $0x68] sm:$0xff] %vm262, %v249
  %277 = vst.msk [vmem:[#allocation2 + $0x70] sm:$0xff] %vm262, %v254
  %278 = vst.msk [vmem:[#allocation2 + $0x78] sm:$0xff] %vm262, %v259
  %v279 = vld [vmem:[%s6] sm:$0xff]
  %v280 = vld [vmem:[%s6 + $0x8] sm:$0xff]
  %v281 = vld [vmem:[%s6 + $0x10] sm:$0xff]
  %v282 = vld [vmem:[%s6 + $0x18] sm:$0xff]
  %v283 = vld [vmem:[%s6 + $0x20] sm:$0xff]
  %v284 = vld [vmem:[%s6 + $0x28] sm:$0xff]
  %v285 = vld [vmem:[%s6 + $0x30] sm:$0xff]
  %v286 = vld [vmem:[%s6 + $0x38] sm:$0xff]
  %v287 = vld [vmem:[%s8] sm:$0x1]
  %v289 = vlaneseq
  %v290 = vshrl.u32 %v289, 7
  %v291 = vsub.s32 0, %v290
  %v292 = vrot.slane %v287, %v291
  %294 = vmatprep.subr.mxu0 0.0
  %295 = vmatpush1.msra.mxu0 %v279
  %296 = vmatprep.subr.mxu0 0.0
  %297 = vmatpush1.msra.mxu0 %v280
  %298 = vmatprep.subr.mxu0 0.0
  %299 = vmatpush1.msra.mxu0 %v281
  %300 = vmatprep.subr.mxu0 0.0
  %301 = vmatpush1.msra.mxu0 %v282
  %302 = vmatprep.subr.mxu0 0.0
  %303 = vmatpush1.msra.mxu0 %v283
  %304 = vmatprep.subr.mxu0 0.0
  %305 = vmatpush1.msra.mxu0 %v284
  %306 = vmatprep.subr.mxu0 0.0
  %307 = vmatpush1.msra.mxu0 %v285
  %308 = vmatprep.subr.mxu0 0.0
  %309 = vmatpush1.msra.mxu0 %v286
  %310 = vmatprep.subr.mxu0 0.0
  %311 = vmatpush1.msra.mxu0 0.0
  %312 = vmatprep.subr.mxu0 0.0
  %313 = vmatpush1.msra.mxu0 0.0
  %314 = vmatprep.subr.mxu0 0.0
  %315 = vmatpush1.msra.mxu0 0.0
  %316 = vmatprep.subr.mxu0 0.0
  %317 = vmatpush1.msra.mxu0 0.0
  %318 = vmatprep.subr.mxu0 0.0
  %319 = vmatpush1.msra.mxu0 0.0
  %320 = vmatprep.subr.mxu0 0.0
  %321 = vmatpush1.msra.mxu0 0.0
  %322 = vmatprep.subr.mxu0 0.0
  %323 = vmatpush1.msra.mxu0 0.0
  %324 = vmatprep.subr.mxu0 0.0
  %325 = vmatpush1.msra.mxu0 0.0
  %326 = vmatprep.subr.mxu0 0.0
  %327 = vmatpush1.msra.mxu0 0.0
  %328 = vmatprep.subr.mxu0 0.0
  %329 = vmatpush1.msra.mxu0 0.0
  %330 = vmatprep.subr.mxu0 0.0
  %331 = vmatpush1.msra.mxu0 0.0
  %332 = vmatprep.subr.mxu0 0.0
  %333 = vmatpush1.msra.mxu0 0.0
  %334 = vmatprep.subr.mxu0 0.0
  %335 = vmatpush1.msra.mxu0 0.0
  %336 = vmatprep.subr.mxu0 0.0
  %337 = vmatpush1.msra.mxu0 0.0
  %338 = vmatprep.subr.mxu0 0.0
  %339 = vmatpush1.msra.mxu0 0.0
  %340 = vmatprep.subr.mxu0 0.0
  %341 = vmatpush1.msra.mxu0 0.0
  %342 = vmatprep.subr.mxu0 0.0
  %343 = vmatpush1.msra.mxu0 0.0
  %344 = vmatprep.subr.mxu0 0.0
  %345 = vmatpush1.msra.mxu0 0.0
  %346 = vmatprep.subr.mxu0 0.0
  %347 = vmatpush1.msra.mxu0 0.0
  %348 = vmatprep.subr.mxu0 0.0
  %349 = vmatpush1.msra.mxu0 0.0
  %350 = vmatprep.subr.mxu0 0.0
  %351 = vmatpush1.msra.mxu0 0.0
  %352 = vmatprep.subr.mxu0 0.0
  %353 = vmatpush1.msra.mxu0 0.0
  %354 = vmatprep.subr.mxu0 0.0
  %355 = vmatpush1.msra.mxu0 0.0
  %356 = vmatprep.subr.mxu0 0.0
  %357 = vmatpush1.msra.mxu0 0.0
  %358 = vmatprep.mubr.f32.mxu0 0.0
  %359 = vmatmul.mubr.f32.gmra.mrb[0].mxu0 %v70
  %v360 = vpop.f32.mrb[0].mxu0
  %v361 = vadd.f32 %v292, %v360
  %v362 = vpop.f32.mrb[0].mxu0
  %363 = vmatprep.mubr.f32.mxu0 0.0
  %364 = vmatmul.mubr.f32.gmra.mrb[0].mxu0 %v73
  %v365 = vpop.f32.mrb[0].mxu0
  %v366 = vadd.f32 %v292, %v365
  %v367 = vpop.f32.mrb[0].mxu0
  %368 = vmatprep.mubr.f32.mxu0 0.0
  %369 = vmatmul.mubr.f32.gmra.mrb[0].mxu0 %v76
  %v370 = vpop.f32.mrb[0].mxu0
  %v371 = vadd.f32 %v292, %v370
  %v372 = vpop.f32.mrb[0].mxu0
  %373 = vmatprep.mubr.f32.mxu0 0.0
  %374 = vmatmul.mubr.f32.gmra.mrb[0].mxu0 %v79
  %v375 = vpop.f32.mrb[0].mxu0
  %v376 = vadd.f32 %v292, %v375
  %v377 = vpop.f32.mrb[0].mxu0
  %378 = vmatprep.mubr.f32.mxu0 0.0
  %379 = vmatmul.mubr.f32.gmra.mrb[0].mxu0 %v82
  %v380 = vpop.f32.mrb[0].mxu0
  %v381 = vadd.f32 %v292, %v380
  %v382 = vpop.f32.mrb[0].mxu0
  %383 = vmatprep.mubr.f32.mxu0 0.0
  %384 = vmatmul.mubr.f32.gmra.mrb[0].mxu0 %v85
  %v385 = vpop.f32.mrb[0].mxu0
  %v386 = vadd.f32 %v292, %v385
  %v387 = vpop.f32.mrb[0].mxu0
  %388 = vmatprep.mubr.f32.mxu0 0.0
  %389 = vmatmul.mubr.f32.gmra.mrb[0].mxu0 %v88
  %v390 = vpop.f32.mrb[0].mxu0
  %v391 = vadd.f32 %v292, %v390
  %v392 = vpop.f32.mrb[0].mxu0
  %393 = vmatprep.mubr.f32.mxu0 0.0
  %394 = vmatmul.mubr.f32.gmra.mrb[0].mxu0 %v91
  %v395 = vpop.f32.mrb[0].mxu0
  %v396 = vadd.f32 %v292, %v395
  %v397 = vpop.f32.mrb[0].mxu0
  %398 = vmatprep.mubr.f32.mxu0 0.0
  %399 = vmatmul.mubr.f32.gmra.mrb[0].mxu0 %v94
  %v400 = vpop.f32.mrb[0].mxu0
  %v401 = vadd.f32 %v292, %v400
  %v402 = vpop.f32.mrb[0].mxu0
  %403 = vmatprep.mubr.f32.mxu0 0.0
  %404 = vmatmul.mubr.f32.gmra.mrb[0].mxu0 %v97
  %v405 = vpop.f32.mrb[0].mxu0
  %v406 = vadd.f32 %v292, %v405
  %v407 = vpop.f32.mrb[0].mxu0
  %408 = vmatprep.mubr.f32.mxu0 0.0
  %409 = vmatmul.mubr.f32.gmra.mrb[0].mxu0 %v100
  %v410 = vpop.f32.mrb[0].mxu0
  %v411 = vadd.f32 %v292, %v410
  %v412 = vpop.f32.mrb[0].mxu0
  %413 = vmatprep.mubr.f32.mxu0 0.0
  %414 = vmatmul.mubr.f32.gmra.mrb[0].mxu0 %v103
  %v415 = vpop.f32.mrb[0].mxu0
  %v416 = vadd.f32 %v292, %v415
  %v417 = vpop.f32.mrb[0].mxu0
  %418 = vmatprep.mubr.f32.mxu0 0.0
  %419 = vmatmul.mubr.f32.gmra.mrb[0].mxu0 %v106
  %v420 = vpop.f32.mrb[0].mxu0
  %v421 = vadd.f32 %v292, %v420
  %v422 = vpop.f32.mrb[0].mxu0
  %423 = vmatprep.mubr.f32.mxu0 0.0
  %424 = vmatmul.mubr.f32.gmra.mrb[0].mxu0 %v109
  %v425 = vpop.f32.mrb[0].mxu0
  %v426 = vadd.f32 %v292, %v425
  %v427 = vpop.f32.mrb[0].mxu0
  %428 = vmatprep.mubr.f32.mxu0 0.0
  %429 = vmatmul.mubr.f32.gmra.mrb[0].mxu0 %v112
  %v430 = vpop.f32.mrb[0].mxu0
  %v431 = vadd.f32 %v292, %v430
  %v432 = vpop.f32.mrb[0].mxu0
  %433 = vmatprep.mubr.f32.mxu0 0.0
  %434 = vmatmul.mubr.f32.gmra.mrb[0].mxu0 %v115
  %v435 = vpop.f32.mrb[0].mxu0
  %v436 = vadd.f32 %v292, %v435
  %v437 = vpop.f32.mrb[0].mxu0
  %438 = vdwg.mxu0
  %439 = vst.msk [vmem:[#allocation3] sm:$0xff] %vm262, %v361
  %440 = vst.msk [vmem:[#allocation3 + $0x8] sm:$0xff] %vm262, %v366
  %441 = vst.msk [vmem:[#allocation3 + $0x10] sm:$0xff] %vm262, %v371
  %442 = vst.msk [vmem:[#allocation3 + $0x18] sm:$0xff] %vm262, %v376
  %443 = vst.msk [vmem:[#allocation3 + $0x20] sm:$0xff] %vm262, %v381
  %444 = vst.msk [vmem:[#allocation3 + $0x28] sm:$0xff] %vm262, %v386
  %445 = vst.msk [vmem:[#allocation3 + $0x30] sm:$0xff] %vm262, %v391
  %446 = vst.msk [vmem:[#allocation3 + $0x38] sm:$0xff] %vm262, %v396
  %447 = vst.msk [vmem:[#allocation3 + $0x40] sm:$0xff] %vm262, %v401
  %448 = vst.msk [vmem:[#allocation3 + $0x48] sm:$0xff] %vm262, %v406
  %449 = vst.msk [vmem:[#allocation3 + $0x50] sm:$0xff] %vm262, %v411
  %450 = vst.msk [vmem:[#allocation3 + $0x58] sm:$0xff] %vm262, %v416
  %451 = vst.msk [vmem:[#allocation3 + $0x60] sm:$0xff] %vm262, %v421
  %452 = vst.msk [vmem:[#allocation3 + $0x68] sm:$0xff] %vm262, %v426
  %453 = vst.msk [vmem:[#allocation3 + $0x70] sm:$0xff] %vm262, %v431
  %454 = vst.msk [vmem:[#allocation3 + $0x78] sm:$0xff] %vm262, %v436
  %vm455 = vcmask 261120
  %456 = vst.msk [vmem:[#allocation4] sm:$0xff] %vm455, 0.0
  %457 = vst.msk [vmem:[#allocation5] sm:$0xff] %vm455, 0.0
  loop: start=0, step=1, limit=16
  $region42: #{encoder_forward.3} parent=0 // loop_pre_header
    _
  $region43: #{encoder_forward.3} parent=0 // loop_header
    %s459 = sphi 0, %s463
    %p460 = scmp.ge.s32.totalorder %s459, 16
  $region44: #{encoder_forward.3} parent=0 // loop_header_branch
    %462 = sbr.rel (%p460) target = $region48
  $region45: #{encoder_forward.3} parent=0 // loop_body
    %s464 = smul.u32 %s459, 8
    %s465 = scalar_lea.vmem %s1, %s464
    %v466 = vld [vmem:[%s465] sm:$0xff]
    %v467 = vld [vmem:[#allocation4] sm:$0xff]
    %s468 = scalar_lea.vmem [#allocation2], %s464
    %v469 = vld [vmem:[%s468] sm:$0xff]
    %v470 = vld [vmem:[%s3] sm:$0xff]
    %v471 = vld [vmem:[%s3 + $0x8] sm:$0xff]
    %v472 = vld [vmem:[%s3 + $0x10] sm:$0xff]
    %v473 = vld [vmem:[%s3 + $0x18] sm:$0xff]
    %v474 = vld [vmem:[%s5] sm:$0x1]
    %v476 = vlaneseq
    %v477 = vshrl.u32 %v476, 7
    %v478 = vsub.s32 0, %v477
    %v479 = vrot.slane %v474, %v478
    %v482 = vsel %vm455, %v467, 0
    %484 = vmatprep.subr.mxu0 0.0
    %485 = vmatpush1.msra.mxu0 %v470
    %486 = vmatprep.subr.mxu0 0.0
    %487 = vmatpush1.msra.mxu0 %v471
    %488 = vmatprep.subr.mxu0 0.0
    %489 = vmatpush1.msra.mxu0 %v472
    %490 = vmatprep.subr.mxu0 0.0
    %491 = vmatpush1.msra.mxu0 %v473
    %492 = vmatprep.subr.mxu0 0.0
    %493 = vmatpush1.msra.mxu0 0.0
    %494 = vmatprep.subr.mxu0 0.0
    %495 = vmatpush1.msra.mxu0 0.0
    %496 = vmatprep.subr.mxu0 0.0
    %497 = vmatpush1.msra.mxu0 0.0
    %498 = vmatprep.subr.mxu0 0.0
    %499 = vmatpush1.msra.mxu0 0.0
    %500 = vmatprep.subr.mxu0 0.0
    %501 = vmatpush1.msra.mxu0 0.0
    %502 = vmatprep.subr.mxu0 0.0
    %503 = vmatpush1.msra.mxu0 0.0
    %504 = vmatprep.subr.mxu0 0.0
    %505 = vmatpush1.msra.mxu0 0.0
    %506 = vmatprep.subr.mxu0 0.0
    %507 = vmatpush1.msra.mxu0 0.0
    %508 = vmatprep.subr.mxu0 0.0
    %509 = vmatpush1.msra.mxu0 0.0
    %510 = vmatprep.subr.mxu0 0.0
    %511 = vmatpush1.msra.mxu0 0.0
    %512 = vmatprep.subr.mxu0 0.0
    %513 = vmatpush1.msra.mxu0 0.0
    %514 = vmatprep.subr.mxu0 0.0
    %515 = vmatpush1.msra.mxu0 0.0
    %516 = vmatprep.subr.mxu0 0.0
    %517 = vmatpush1.msra.mxu0 0.0
    %518 = vmatprep.subr.mxu0 0.0
    %519 = vmatpush1.msra.mxu0 0.0
    %520 = vmatprep.subr.mxu0 0.0
    %521 = vmatpush1.msra.mxu0 0.0
    %522 = vmatprep.subr.mxu0 0.0
    %523 = vmatpush1.msra.mxu0 0.0
    %524 = vmatprep.subr.mxu0 0.0
    %525 = vmatpush1.msra.mxu0 0.0
    %526 = vmatprep.subr.mxu0 0.0
    %527 = vmatpush1.msra.mxu0 0.0
    %528 = vmatprep.subr.mxu0 0.0
    %529 = vmatpush1.msra.mxu0 0.0
    %530 = vmatprep.subr.mxu0 0.0
    %531 = vmatpush1.msra.mxu0 0.0
    %532 = vmatprep.subr.mxu0 0.0
    %533 = vmatpush1.msra.mxu0 0.0
    %534 = vmatprep.subr.mxu0 0.0
    %535 = vmatpush1.msra.mxu0 0.0
    %536 = vmatprep.subr.mxu0 0.0
    %537 = vmatpush1.msra.mxu0 0.0
    %538 = vmatprep.subr.mxu0 0.0
    %539 = vmatpush1.msra.mxu0 0.0
    %540 = vmatprep.subr.mxu0 0.0
    %541 = vmatpush1.msra.mxu0 0.0
    %542 = vmatprep.subr.mxu0 0.0
    %543 = vmatpush1.msra.mxu0 0.0
    %544 = vmatprep.subr.mxu0 0.0
    %545 = vmatpush1.msra.mxu0 0.0
    %546 = vmatprep.subr.mxu0 0.0
    %547 = vmatpush1.msra.mxu0 0.0
    %548 = vmatprep.mubr.f32.mxu0 0.0
    %549 = vmatmul.mubr.f32.gmra.mrb[0].mxu0 %v482
    %v550 = vpop.f32.mrb[0].mxu0
    %v551 = vadd.f32 %v479, %v550
    %v552 = vpop.f32.mrb[0].mxu0
    %553 = vdwg.mxu0
    %v554 = vadd.f32 %v469, %v551
    %v555 = vxor.u32 %v554, 2147483648
    %v556 = vmul.f32 %v555, 1.442695
    %v557 = vpow.pop %v556
    %v558 = vadd.f32 %v557, 1.0
    %v559 = vrcp.pop %v558
    %v560 = vmul.f32 1.0, %v559
    %562 = vrot.lane.b32.xlu0 %v551, 64
    %v563 = vpop.permute.xlu0 %562
    %v565 = vmul.f32 %v560, %v563
    %567 = vrot.lane.b32.xlu0 %v565, 64
    %v568 = vpop.permute.xlu0 %567
    %v570 = vadd.f32 %v469, %v568
    %v571 = vtanh.pop %v570
    %v572 = vsub.f32 1.0, %v560
    %574 = vrot.lane.b32.xlu0 %v571, 96
    %v575 = vpop.permute.xlu0 %574
    %v577 = vmul.f32 %v572, %v575
    %578 = vrot.lane.b32.xlu0 %v467, 32
    %v579 = vpop.permute.xlu0 %578
    %v581 = vmul.f32 %v560, %v579
    %v582 = vadd.f32 %v577, %v581
    %584 = vrot.lane.b32.xlu0 %v466, 32
    %v585 = vpop.permute.xlu0 %584
    %v587 = vmul.f32 %v582, %v585
    %589 = vrot.lane.b32.xlu0 %v587, 96
    %v590 = vpop.permute.xlu0 %589
    %s592 = scalar_lea.vmem %s10, %s464
    %593 = vst.msk [vmem:[%s592] sm:$0xff] %vm455, %v590
    %v594 = vsub.f32 1.0, %v466
    %v595 = vmul.f32 %v467, %v594
    %597 = vrot.lane.b32.xlu0 %v595, 32
    %v598 = vpop.permute.xlu0 %597
    %v600 = vadd.f32 %v587, %v598
    %602 = vrot.lane.b32.xlu0 %v600, 96
    %v603 = vpop.permute.xlu0 %602
    %605 = vst.msk [vmem:[#allocation4] sm:$0xff] %vm455, %v603
    %s606 = ssub.s32 15, %s459
    %s607 = smul.u32 %s606, 8
    %s608 = scalar_lea.vmem %s1, %s607
    %v609 = vld [vmem:[%s608] sm:$0xff]
    %v610 = vld [vmem:[#allocation5] sm:$0xff]
    %s611 = scalar_lea.vmem [#allocation3], %s607
    %v612 = vld [vmem:[%s611] sm:$0xff]
    %v613 = vld [vmem:[%s7] sm:$0xff]
    %v614 = vld [vmem:[%s7 + $0x8] sm:$0xff]
    %v615 = vld [vmem:[%s7 + $0x10] sm:$0xff]
    %v616 = vld [vmem:[%s7 + $0x18] sm:$0xff]
    %v617 = vld [vmem:[%s9] sm:$0x1]
    %v619 = vlaneseq
    %v620 = vshrl.u32 %v619, 7
    %v621 = vsub.s32 0, %v620
    %v622 = vrot.slane %v617, %v621
    %v625 = vsel %vm455, %v610, 0
    %627 = vmatprep.subr.mxu0 0.0
    %628 = vmatpush1.msra.mxu0 %v613
    %629 = vmatprep.subr.mxu0 0.0
    %630 = vmatpush1.msra.mxu0 %v614
    %631 = vmatprep.subr.mxu0 0.0
    %632 = vmatpush1.msra.mxu0 %v615
    %633 = vmatprep.subr.mxu0 0.0
    %634 = vmatpush1.msra.mxu0 %v616
    %635 = vmatprep.subr.mxu0 0.0
    %636 = vmatpush1.msra.mxu0 0.0
    %637 = vmatprep.subr.mxu0 0.0
    %638 = vmatpush1.msra.mxu0 0.0
    %639 = vmatprep.subr.mxu0 0.0
    %640 = vmatpush1.msra.mxu0 0.0
    %641 = vmatprep.subr.mxu0 0.0
    %642 = vmatpush1.msra.mxu0 0.0
    %643 = vmatprep.subr.mxu0 0.0
    %644 = vmatpush1.msra.mxu0 0.0
    %645 = vmatprep.subr.mxu0 0.0
    %646 = vmatpush1.msra.mxu0 0.0
    %647 = vmatprep.subr.mxu0 0.0
    %648 = vmatpush1.msra.mxu0 0.0
    %649 = vmatprep.subr.mxu0 0.0
    %650 = vmatpush1.msra.mxu0 0.0
    %651 = vmatprep.subr.mxu0 0.0
    %652 = vmatpush1.msra.mxu0 0.0
    %653 = vmatprep.subr.mxu0 0.0
    %654 = vmatpush1.msra.mxu0 0.0
    %655 = vmatprep.subr.mxu0 0.0
    %656 = vmatpush1.msra.mxu0 0.0
    %657 = vmatprep.subr.mxu0 0.0
    %658 = vmatpush1.msra.mxu0 0.0
    %659 = vmatprep.subr.mxu0 0.0
    %660 = vmatpush1.msra.mxu0 0.0
    %661 = vmatprep.subr.mxu0 0.0
    %662 = vmatpush1.msra.mxu0 0.0
    %663 = vmatprep.subr.mxu0 0.0
    %664 = vmatpush1.msra.mxu0 0.0
    %665 = vmatprep.subr.mxu0 0.0
    %666 = vmatpush1.msra.mxu0 0.0
    %667 = vmatprep.subr.mxu0 0.0
    %668 = vmatpush1.msra.mxu0 0.0
    %669 = vmatprep.subr.mxu0 0.0
    %670 = vmatpush1.msra.mxu0 0.0
    %671 = vmatprep.subr.mxu0 0.0
    %672 = vmatpush1.msra.mxu0 0.0
    %673 = vmatprep.subr.mxu0 0.0
    %674 = vmatpush1.msra.mxu0 0.0
    %675 = vmatprep.subr.mxu0 0.0
    %676 = vmatpush1.msra.mxu0 0.0
    %677 = vmatprep.subr.mxu0 0.0
    %678 = vmatpush1.msra.mxu0 0.0
    %679 = vmatprep.subr.mxu0 0.0
    %680 = vmatpush1.msra.mxu0 0.0
    %681 = vmatprep.subr.mxu0 0.0
    %682 = vmatpush1.msra.mxu0 0.0
    %683 = vmatprep.subr.mxu0 0.0
    %684 = vmatpush1.msra.mxu0 0.0
    %685 = vmatprep.subr.mxu0 0.0
    %686 = vmatpush1.msra.mxu0 0.0
    %687 = vmatprep.subr.mxu0 0.0
    %688 = vmatpush1.msra.mxu0 0.0
    %689 = vmatprep.subr.mxu0 0.0
    %690 = vmatpush1.msra.mxu0 0.0
    %691 = vmatprep.mubr.f32.mxu0 0.0
    %692 = vmatmul.mubr.f32.gmra.mrb[0].mxu0 %v625
    %v693 = vpop.f32.mrb[0].mxu0
    %v694 = vadd.f32 %v622, %v693
    %v695 = vpop.f32.mrb[0].mxu0
    %696 = vdwg.mxu0
    %v697 = vadd.f32 %v612, %v694
    %v698 = vxor.u32 %v697, 2147483648
    %v699 = vmul.f32 %v698, 1.442695
    %v700 = vpow.pop %v699
    %v701 = vadd.f32 %v700, 1.0
    %v702 = vrcp.pop %v701
    %v703 = vmul.f32 1.0, %v702
    %705 = vrot.lane.b32.xlu0 %v694, 64
    %v706 = vpop.permute.xlu0 %705
    %v708 = vmul.f32 %v703, %v706
    %710 = vrot.lane.b32.xlu0 %v708, 64
    %v711 = vpop.permute.xlu0 %710
    %v713 = vadd.f32 %v612, %v711
    %v714 = vtanh.pop %v713
    %v715 = vsub.f32 1.0, %v703
    %717 = vrot.lane.b32.xlu0 %v714, 96
    %v718 = vpop.permute.xlu0 %717
    %v720 = vmul.f32 %v715, %v718
    %721 = vrot.lane.b32.xlu0 %v610, 32
    %v722 = vpop.permute.xlu0 %721
    %v724 = vmul.f32 %v703, %v722
    %v725 = vadd.f32 %v720, %v724
    %727 = vrot.lane.b32.xlu0 %v609, 32
    %v728 = vpop.permute.xlu0 %727
    %v730 = vmul.f32 %v725, %v728
    %732 = vrot.lane.b32.xlu0 %v730, 96
    %v733 = vpop.permute.xlu0 %732
    %s735 = scalar_lea.vmem %s11, %s607
    %736 = vst.msk [vmem:[%s735] sm:$0xff] %vm455, %v733
    %v737 = vsub.f32 1.0, %v609
    %v738 = vmul.f32 %v610, %v737
    %740 = vrot.lane.b32.xlu0 %v738, 32
    %v741 = vpop.permute.xlu0 %740
    %v743 = vadd.f32 %v730, %v741
    %745 = vrot.lane.b32.xlu0 %v743, 96
    %v746 = vpop.permute.xlu0 %745
    %748 = vst.msk [vmem:[#allocation5] sm:$0xff] %vm455, %v746
  $region46: #{encoder_forward.3} parent=0 // loop_footer
    %s463 = sadd.s32 1, %s459
  $region47: #{encoder_forward.3} parent=0 // loop_footer_branch
    %458 = sbr.rel target = $region43
  $region48: #{encoder_forward.3} parent=0 // loop_exit
    _
  // Predicated region
  $region49: #{encoder_forward.3} parent=0 // pred_check
    _
  $region50: #{encoder_forward.3} parent=0 // pred_check_branch
    %750 = sbr.rel (0) target = $region52
  $region51: #{encoder_forward.3} parent=0 // pred_region
    _
  $region52: #{encoder_forward.3} parent=0 // pred_fallthru
    _
  // Predicated region
  $region53: #{encoder_forward.3} parent=0 // pred_check
    _
  $region54: #{encoder_forward.3} parent=0 // pred_check_branch
    %752 = sbr.rel (0) target = $region56
  $region55: #{encoder_forward.3} parent=0 // pred_region
    _
  $region56: #{encoder_forward.3} parent=0 // pred_fallthru
    _
  // Predicated region
  $region57: #{encoder_forward.3} parent=0 // pred_check
    _
  $region58: #{encoder_forward.3} parent=0 // pred_check_branch
    %754 = sbr.rel (0) target = $region60
  $region59: #{encoder_forward.3} parent=0 // pred_region
    _
  $region60: #{encoder_forward.3} parent=0 // pred_fallthru
    _
  // Predicated region
  $region61: #{encoder_forward.3} parent=0 // pred_check
    _
  $region62: #{encoder_forward.3} parent=0 // pred_check_branch
    %756 = sbr.rel (0) target = $region64
  $region63: #{encoder_forward.3} parent=0 // pred_region
    _
  $region64: #{encoder_forward.3} parent=0 // pred_fallthru
    _

// kernel: encoder_forward.2
$region0: #{encoder_forward.2}
  #allocation0 [shape = 'u32[]', space=smem, size = 0x4, offset = 0x4, fixed_abs, tag = 'smem constant byte address 0x4 - core index']
  #allocation1 [shape = 'u32[144,128]{1,0:T(1,128)}', space=vmem, size = 0x12000, scoped, tag = 'internal scratch']
  #allocation2 [shape = 'f32[128,96]{1,0:T(8,128)}', space=vmem, size = 0x10000, scoped, tag = 'scratch operand']
  #allocation3 [shape = 'f32[128,96]{1,0:T(8,128)}', space=vmem, size = 0x10000, scoped, tag = 'scratch operand']
  #allocation4 [shape = 'f32[8,32]{1,0:T(8,128)}', space=vmem, size = 0x1000, scoped, tag = 'scratch operand']
  #allocation5 [shape = 'f32[8,32]{1,0:T(8,128)}', space=vmem, size = 0x1000, scoped, tag = 'scratch operand']
  %s0 = inlined_call_operand.vmem [shape: f32[128,32], index: 0, kind: input, shape index: {}]
  %s1 = inlined_call_operand.vmem [shape: f32[16,8,32], index: 1, kind: input, shape index: {}]
  %s2 = inlined_call_operand.vmem [shape: f32[32,96], index: 2, kind: input, shape index: {}]
  %s3 = inlined_call_operand.vmem [shape: f32[32,96], index: 3, kind: input, shape index: {}]
  %s4 = inlined_call_operand.vmem [shape: f32[1,96], index: 4, kind: input, shape index: {}]
  %s5 = inlined_call_operand.vmem [shape: f32[1,96], index: 5, kind: input, shape index: {}]
  %s6 = inlined_call_operand.vmem [shape: f32[32,96], index: 6, kind: input, shape index: {}]
  %s7 = inlined_call_operand.vmem [shape: f32[32,96], index: 7, kind: input, shape index: {}]
  %s8 = inlined_call_operand.vmem [shape: f32[1,96], index: 8, kind: input, shape index: {}]
  %s9 = inlined_call_operand.vmem [shape: f32[1,96], index: 9, kind: input, shape index: {}]
  %s10 = inlined_call_operand.vmem [shape: f32[16,8,32], index: 10, kind: output, shape index: {0}]
  %s11 = inlined_call_operand.vmem [shape: f32[16,8,32], index: 11, kind: output, shape index: {1}]
  %12 = xla_tuple %s10, %s11
  %s13 = sld [smem:[#allocation0]]
  $region65: #{encoder_forward.2} parent=0
    _
  %s15 = ssub.s32 1, %s13
  %s16 = scalar_select 0, %s15, %s13
  // Predicated region
  $region2: #{encoder_forward.2} parent=0 // pred_check
    _
  $region3: #{encoder_forward.2} parent=0 // pred_check_branch
    %18 = sbr.rel (0) target = $region5
  $region4: #{encoder_forward.2} parent=0 // pred_region
    _
  $region5: #{encoder_forward.2} parent=0 // pred_fallthru
    _
  // Predicated region
  $region6: #{encoder_forward.2} parent=0 // pred_check
    _
  $region7: #{encoder_forward.2} parent=0 // pred_check_branch
    %20 = sbr.rel (0) target = $region9
  $region8: #{encoder_forward.2} parent=0 // pred_region
    _
  $region9: #{encoder_forward.2} parent=0 // pred_fallthru
    _
  // Predicated region
  $region10: #{encoder_forward.2} parent=0 // pred_check
    _
  $region11: #{encoder_forward.2} parent=0 // pred_check_branch
    %22 = sbr.rel (0) target = $region13
  $region12: #{encoder_forward.2} parent=0 // pred_region
    _
  $region13: #{encoder_forward.2} parent=0 // pred_fallthru
    _
  // Predicated region
  $region14: #{encoder_forward.2} parent=0 // pred_check
    _
  $region15: #{encoder_forward.2} parent=0 // pred_check_branch
    %24 = sbr.rel (0) target = $region17
  $region16: #{encoder_forward.2} parent=0 // pred_region
    _
  $region17: #{encoder_forward.2} parent=0 // pred_fallthru
    _
  // Predicated region
  $region18: #{encoder_forward.2} parent=0 // pred_check
    _
  $region19: #{encoder_forward.2} parent=0 // pred_check_branch
    %26 = sbr.rel (0) target = $region21
  $region20: #{encoder_forward.2} parent=0 // pred_region
    _
  $region21: #{encoder_forward.2} parent=0 // pred_fallthru
    _
  // Predicated region
  $region22: #{encoder_forward.2} parent=0 // pred_check
    _
  $region23: #{encoder_forward.2} parent=0 // pred_check_branch
    %28 = sbr.rel (0) target = $region25
  $region24: #{encoder_forward.2} parent=0 // pred_region
    _
  $region25: #{encoder_forward.2} parent=0 // pred_fallthru
    _
  // Predicated region
  $region26: #{encoder_forward.2} parent=0 // pred_check
    _
  $region27: #{encoder_forward.2} parent=0 // pred_check_branch
    %30 = sbr.rel (0) target = $region29
  $region28: #{encoder_forward.2} parent=0 // pred_region
    _
  $region29: #{encoder_forward.2} parent=0 // pred_fallthru
    _
  // Predicated region
  $region30: #{encoder_forward.2} parent=0 // pred_check
    _
  $region31: #{encoder_forward.2} parent=0 // pred_check_branch
    %32 = sbr.rel (0) target = $region33
  $region32: #{encoder_forward.2} parent=0 // pred_region
    _
  $region33: #{encoder_forward.2} parent=0 // pred_fallthru
    _
  // Predicated region
  $region34: #{encoder_forward.2} parent=0 // pred_check
    _
  $region35: #{encoder_forward.2} parent=0 // pred_check_branch
    %34 = sbr.rel (0) target = $region37
  $region36: #{encoder_forward.2} parent=0 // pred_region
    _
  $region37: #{encoder_forward.2} parent=0 // pred_fallthru
    _
  // Predicated region
  $region38: #{encoder_forward.2} parent=0 // pred_check
    _
  $region39: #{encoder_forward.2} parent=0 // pred_check_branch
    %36 = sbr.rel (0) target = $region41
  $region40: #{encoder_forward.2} parent=0 // pred_region
    _
  $region41: #{encoder_forward.2} parent=0 // pred_fallthru
    _
  %v37 = vld [vmem:[%s0] sm:$0xff]
  %v38 = vld [vmem:[%s0 + $0x8] sm:$0xff]
  %v39 = vld [vmem:[%s0 + $0x10] sm:$0xff]
  %v40 = vld [vmem:[%s0 + $0x18] sm:$0xff]
  %v41 = vld [vmem:[%s0 + $0x20] sm:$0xff]
  %v42 = vld [vmem:[%s0 + $0x28] sm:$0xff]
  %v43 = vld [vmem:[%s0 + $0x30] sm:$0xff]
  %v44 = vld [vmem:[%s0 + $0x38] sm:$0xff]
  %v45 = vld [vmem:[%s0 + $0x40] sm:$0xff]
  %v46 = vld [vmem:[%s0 + $0x48] sm:$0xff]
  %v47 = vld [vmem:[%s0 + $0x50] sm:$0xff]
  %v48 = vld [vmem:[%s0 + $0x58] sm:$0xff]
  %v49 = vld [vmem:[%s0 + $0x60] sm:$0xff]
  %v50 = vld [vmem:[%s0 + $0x68] sm:$0xff]
  %v51 = vld [vmem:[%s0 + $0x70] sm:$0xff]
  %v52 = vld [vmem:[%s0 + $0x78] sm:$0xff]
  %v53 = vld [vmem:[%s2] sm:$0xff]
  %v54 = vld [vmem:[%s2 + $0x8] sm:$0xff]
  %v55 = vld [vmem:[%s2 + $0x10] sm:$0xff]
  %v56 = vld [vmem:[%s2 + $0x18] sm:$0xff]
  %v57 = vld [vmem:[%s4] sm:$0x1]
  %v59 = vlaneseq
  %v60 = vshrl.u32 %v59, 7
  %v61 = vsub.s32 0, %v60
  %v62 = vrot.slane %v57, %v61
  %vm64 = vcmask 261120
  %v66 = vsel %vm64, %v37, 0
  %v69 = vsel %vm64, %v38, 0
  %v72 = vsel %vm64, %v39, 0
  %v75 = vsel %vm64, %v40, 0
  %v78 = vsel %vm64, %v41, 0
  %v81 = vsel %vm64, %v42, 0
  %v84 = vsel %vm64, %v43, 0
  %v87 = vsel %vm64, %v44, 0
  %v90 = vsel %vm64, %v45, 0
  %v93 = vsel %vm64, %v46, 0
  %v96 = vsel %vm64, %v47, 0
  %v99 = vsel %vm64, %v48, 0
  %v102 = vsel %vm64, %v49, 0
  %v105 = vsel %vm64, %v50, 0
  %v108 = vsel %vm64, %v51, 0
  %v111 = vsel %vm64, %v52, 0
  %113 = vmatprep.subr.mxu0 0.0
  %114 = vmatpush1.msra.mxu0 %v53
  %115 = vmatprep.subr.mxu0 0.0
  %116 = vmatpush1.msra.mxu0 %v54
  %117 = vmatprep.subr.mxu0 0.0
  %118 = vmatpush1.msra.mxu0 %v55
  %119 = vmatprep.subr.mxu0 0.0
  %120 = vmatpush1.msra.mxu0 %v56
  %121 = vmatprep.subr.mxu0 0.0
  %122 = vmatpush1.msra.mxu0 0.0
  %123 = vmatprep.subr.mxu0 0.0
  %124 = vmatpush1.msra.mxu0 0.0
  %125 = vmatprep.subr.mxu0 0.0
  %126 = vmatpush1.msra.mxu0 0.0
  %127 = vmatprep.subr.mxu0 0.0
  %128 = vmatpush1.msra.mxu0 0.0
  %129 = vmatprep.subr.mxu0 0.0
  %130 = vmatpush1.msra.mxu0 0.0
  %131 = vmatprep.subr.mxu0 0.0
  %132 = vmatpush1.msra.mxu0 0.0
  %133 = vmatprep.subr.mxu0 0.0
  %134 = vmatpush1.msra.mxu0 0.0
  %135 = vmatprep.subr.mxu0 0.0
  %136 = vmatpush1.msra.mxu0 0.0
  %137 = vmatprep.subr.mxu0 0.0
  %138 = vmatpush1.msra.mxu0 0.0
  %139 = vmatprep.subr.mxu0 0.0
  %140 = vmatpush1.msra.mxu0 0.0
  %141 = vmatprep.subr.mxu0 0.0
  %142 = vmatpush1.msra.mxu0 0.0
  %143 = vmatprep.subr.mxu0 0.0
  %144 = vmatpush1.msra.mxu0 0.0
  %145 = vmatprep.subr.mxu0 0.0
  %146 = vmatpush1.msra.mxu0 0.0
  %147 = vmatprep.subr.mxu0 0.0
  %148 = vmatpush1.msra.mxu0 0.0
  %149 = vmatprep.subr.mxu0 0.0
  %150 = vmatpush1.msra.mxu0 0.0
  %151 = vmatprep.subr.mxu0 0.0
  %152 = vmatpush1.msra.mxu0 0.0
  %153 = vmatprep.subr.mxu0 0.0
  %154 = vmatpush1.msra.mxu0 0.0
  %155 = vmatprep.subr.mxu0 0.0
  %156 = vmatpush1.msra.mxu0 0.0
  %157 = vmatprep.subr.mxu0 0.0
  %158 = vmatpush1.msra.mxu0 0.0
  %159 = vmatprep.subr.mxu0 0.0
  %160 = vmatpush1.msra.mxu0 0.0
  %161 = vmatprep.subr.mxu0 0.0
  %162 = vmatpush1.msra.mxu0 0.0
  %163 = vmatprep.subr.mxu0 0.0
  %164 = vmatpush1.msra.mxu0 0.0
  %165 = vmatprep.subr.mxu0 0.0
  %166 = vmatpush1.msra.mxu0 0.0
  %167 = vmatprep.subr.mxu0 0.0
  %168 = vmatpush1.msra.mxu0 0.0
  %169 = vmatprep.subr.mxu0 0.0
  %170 = vmatpush1.msra.mxu0 0.0
  %171 = vmatprep.subr.mxu0 0.0
  %172 = vmatpush1.msra.mxu0 0.0
  %173 = vmatprep.subr.mxu0 0.0
  %174 = vmatpush1.msra.mxu0 0.0
  %175 = vmatprep.subr.mxu0 0.0
  %176 = vmatpush1.msra.mxu0 0.0
  %177 = vmatprep.mubr.f32.mxu0 0.0
  %178 = vmatmul.mubr.f32.gmra.mrb[0].mxu0 %v66
  %v179 = vpop.f32.mrb[0].mxu0
  %v180 = vadd.f32 %v62, %v179
  %v181 = vpop.f32.mrb[0].mxu0
  %182 = vmatprep.mubr.f32.mxu0 0.0
  %183 = vmatmul.mubr.f32.gmra.mrb[0].mxu0 %v69
  %v184 = vpop.f32.mrb[0].mxu0
  %v185 = vadd.f32 %v62, %v184
  %v186 = vpop.f32.mrb[0].mxu0
  %187 = vmatprep.mubr.f32.mxu0 0.0
  %188 = vmatmul.mubr.f32.gmra.mrb[0].mxu0 %v72
  %v189 = vpop.f32.mrb[0].mxu0
  %v190 = vadd.f32 %v62, %v189
  %v191 = vpop.f32.mrb[0].mxu0
  %192 = vmatprep.mubr.f32.mxu0 0.0
  %193 = vmatmul.mubr.f32.gmra.mrb[0].mxu0 %v75
  %v194 = vpop.f32.mrb[0].mxu0
  %v195 = vadd.f32 %v62, %v194
  %v196 = vpop.f32.mrb[0].mxu0
  %197 = vmatprep.mubr.f32.mxu0 0.0
  %198 = vmatmul.mubr.f32.gmra.mrb[0].mxu0 %v78
  %v199 = vpop.f32.mrb[0].mxu0
  %v200 = vadd.f32 %v62, %v199
  %v201 = vpop.f32.mrb[0].mxu0
  %202 = vmatprep.mubr.f32.mxu0 0.0
  %203 = vmatmul.mubr.f32.gmra.mrb[0].mxu0 %v81
  %v204 = vpop.f32.mrb[0].mxu0
  %v205 = vadd.f32 %v62, %v204
  %v206 = vpop.f32.mrb[0].mxu0
  %207 = vmatprep.mubr.f32.mxu0 0.0
  %208 = vmatmul.mubr.f32.gmra.mrb[0].mxu0 %v84
  %v209 = vpop.f32.mrb[0].mxu0
  %v210 = vadd.f32 %v62, %v209
  %v211 = vpop.f32.mrb[0].mxu0
  %212 = vmatprep.mubr.f32.mxu0 0.0
  %213 = vmatmul.mubr.f32.gmra.mrb[0].mxu0 %v87
  %v214 = vpop.f32.mrb[0].mxu0
  %v215 = vadd.f32 %v62, %v214
  %v216 = vpop.f32.mrb[0].mxu0
  %217 = vmatprep.mubr.f32.mxu0 0.0
  %218 = vmatmul.mubr.f32.gmra.mrb[0].mxu0 %v90
  %v219 = vpop.f32.mrb[0].mxu0
  %v220 = vadd.f32 %v62, %v219
  %v221 = vpop.f32.mrb[0].mxu0
  %222 = vmatprep.mubr.f32.mxu0 0.0
  %223 = vmatmul.mubr.f32.gmra.mrb[0].mxu0 %v93
  %v224 = vpop.f32.mrb[0].mxu0
  %v225 = vadd.f32 %v62, %v224
  %v226 = vpop.f32.mrb[0].mxu0
  %227 = vmatprep.mubr.f32.mxu0 0.0
  %228 = vmatmul.mubr.f32.gmra.mrb[0].mxu0 %v96
  %v229 = vpop.f32.mrb[0].mxu0
  %v230 = vadd.f32 %v62, %v229
  %v231 = vpop.f32.mrb[0].mxu0
  %232 = vmatprep.mubr.f32.mxu0 0.0
  %233 = vmatmul.mubr.f32.gmra.mrb[0].mxu0 %v99
  %v234 = vpop.f32.mrb[0].mxu0
  %v235 = vadd.f32 %v62, %v234
  %v236 = vpop.f32.mrb[0].mxu0
  %237 = vmatprep.mubr.f32.mxu0 0.0
  %238 = vmatmul.mubr.f32.gmra.mrb[0].mxu0 %v102
  %v239 = vpop.f32.mrb[0].mxu0
  %v240 = vadd.f32 %v62, %v239
  %v241 = vpop.f32.mrb[0].mxu0
  %242 = vmatprep.mubr.f32.mxu0 0.0
  %243 = vmatmul.mubr.f32.gmra.mrb[0].mxu0 %v105
  %v244 = vpop.f32.mrb[0].mxu0
  %v245 = vadd.f32 %v62, %v244
  %v246 = vpop.f32.mrb[0].mxu0
  %247 = vmatprep.mubr.f32.mxu0 0.0
  %248 = vmatmul.mubr.f32.gmra.mrb[0].mxu0 %v108
  %v249 = vpop.f32.mrb[0].mxu0
  %v250 = vadd.f32 %v62, %v249
  %v251 = vpop.f32.mrb[0].mxu0
  %252 = vmatprep.mubr.f32.mxu0 0.0
  %253 = vmatmul.mubr.f32.gmra.mrb[0].mxu0 %v111
  %v254 = vpop.f32.mrb[0].mxu0
  %v255 = vadd.f32 %v62, %v254
  %v256 = vpop.f32.mrb[0].mxu0
  %257 = vdwg.mxu0
  %vm258 = vcmask 785408
  %259 = vst.msk [vmem:[#allocation2] sm:$0xff] %vm258, %v180
  %260 = vst.msk [vmem:[#allocation2 + $0x8] sm:$0xff] %vm258, %v185
  %261 = vst.msk [vmem:[#allocation2 + $0x10] sm:$0xff] %vm258, %v190
  %262 = vst.msk [vmem:[#allocation2 + $0x18] sm:$0xff] %vm258, %v195
  %263 = vst.msk [vmem:[#allocation2 + $0x20] sm:$0xff] %vm258, %v200
  %264 = vst.msk [vmem:[#allocation2 + $0x28] sm:$0xff] %vm258, %v205
  %265 = vst.msk [vmem:[#allocation2 + $0x30] sm:$0xff] %vm258, %v210
  %266 = vst.msk [vmem:[#allocation2 + $0x38] sm:$0xff] %vm258, %v215
  %267 = vst.msk [vmem:[#allocation2 + $0x40] sm:$0xff] %vm258, %v220
  %268 = vst.msk [vmem:[#allocation2 + $0x48] sm:$0xff] %vm258, %v225
  %269 = vst.msk [vmem:[#allocation2 + $0x50] sm:$0xff] %vm258, %v230
  %270 = vst.msk [vmem:[#allocation2 + $0x58] sm:$0xff] %vm258, %v235
  %271 = vst.msk [vmem:[#allocation2 + $0x60] sm:$0xff] %vm258, %v240
  %272 = vst.msk [vmem:[#allocation2 + $0x68] sm:$0xff] %vm258, %v245
  %273 = vst.msk [vmem:[#allocation2 + $0x70] sm:$0xff] %vm258, %v250
  %274 = vst.msk [vmem:[#allocation2 + $0x78] sm:$0xff] %vm258, %v255
  %v275 = vld [vmem:[%s6] sm:$0xff]
  %v276 = vld [vmem:[%s6 + $0x8] sm:$0xff]
  %v277 = vld [vmem:[%s6 + $0x10] sm:$0xff]
  %v278 = vld [vmem:[%s6 + $0x18] sm:$0xff]
  %v279 = vld [vmem:[%s8] sm:$0x1]
  %v281 = vlaneseq
  %v282 = vshrl.u32 %v281, 7
  %v283 = vsub.s32 0, %v282
  %v284 = vrot.slane %v279, %v283
  %286 = vmatprep.subr.mxu0 0.0
  %287 = vmatpush1.msra.mxu0 %v275
  %288 = vmatprep.subr.mxu0 0.0
  %289 = vmatpush1.msra.mxu0 %v276
  %290 = vmatprep.subr.mxu0 0.0
  %291 = vmatpush1.msra.mxu0 %v277
  %292 = vmatprep.subr.mxu0 0.0
  %293 = vmatpush1.msra.mxu0 %v278
  %294 = vmatprep.subr.mxu0 0.0
  %295 = vmatpush1.msra.mxu0 0.0
  %296 = vmatprep.subr.mxu0 0.0
  %297 = vmatpush1.msra.mxu0 0.0
  %298 = vmatprep.subr.mxu0 0.0
  %299 = vmatpush1.msra.mxu0 0.0
  %300 = vmatprep.subr.mxu0 0.0
  %301 = vmatpush1.msra.mxu0 0.0
  %302 = vmatprep.subr.mxu0 0.0
  %303 = vmatpush1.msra.mxu0 0.0
  %304 = vmatprep.subr.mxu0 0.0
  %305 = vmatpush1.msra.mxu0 0.0
  %306 = vmatprep.subr.mxu0 0.0
  %307 = vmatpush1.msra.mxu0 0.0
  %308 = vmatprep.subr.mxu0 0.0
  %309 = vmatpush1.msra.mxu0 0.0
  %310 = vmatprep.subr.mxu0 0.0
  %311 = vmatpush1.msra.mxu0 0.0
  %312 = vmatprep.subr.mxu0 0.0
  %313 = vmatpush1.msra.mxu0 0.0
  %314 = vmatprep.subr.mxu0 0.0
  %315 = vmatpush1.msra.mxu0 0.0
  %316 = vmatprep.subr.mxu0 0.0
  %317 = vmatpush1.msra.mxu0 0.0
  %318 = vmatprep.subr.mxu0 0.0
  %319 = vmatpush1.msra.mxu0 0.0
  %320 = vmatprep.subr.mxu0 0.0
  %321 = vmatpush1.msra.mxu0 0.0
  %322 = vmatprep.subr.mxu0 0.0
  %323 = vmatpush1.msra.mxu0 0.0
  %324 = vmatprep.subr.mxu0 0.0
  %325 = vmatpush1.msra.mxu0 0.0
  %326 = vmatprep.subr.mxu0 0.0
  %327 = vmatpush1.msra.mxu0 0.0
  %328 = vmatprep.subr.mxu0 0.0
  %329 = vmatpush1.msra.mxu0 0.0
  %330 = vmatprep.subr.mxu0 0.0
  %331 = vmatpush1.msra.mxu0 0.0
  %332 = vmatprep.subr.mxu0 0.0
  %333 = vmatpush1.msra.mxu0 0.0
  %334 = vmatprep.subr.mxu0 0.0
  %335 = vmatpush1.msra.mxu0 0.0
  %336 = vmatprep.subr.mxu0 0.0
  %337 = vmatpush1.msra.mxu0 0.0
  %338 = vmatprep.subr.mxu0 0.0
  %339 = vmatpush1.msra.mxu0 0.0
  %340 = vmatprep.subr.mxu0 0.0
  %341 = vmatpush1.msra.mxu0 0.0
  %342 = vmatprep.subr.mxu0 0.0
  %343 = vmatpush1.msra.mxu0 0.0
  %344 = vmatprep.subr.mxu0 0.0
  %345 = vmatpush1.msra.mxu0 0.0
  %346 = vmatprep.subr.mxu0 0.0
  %347 = vmatpush1.msra.mxu0 0.0
  %348 = vmatprep.subr.mxu0 0.0
  %349 = vmatpush1.msra.mxu0 0.0
  %350 = vmatprep.mubr.f32.mxu0 0.0
  %351 = vmatmul.mubr.f32.gmra.mrb[0].mxu0 %v66
  %v352 = vpop.f32.mrb[0].mxu0
  %v353 = vadd.f32 %v284, %v352
  %v354 = vpop.f32.mrb[0].mxu0
  %355 = vmatprep.mubr.f32.mxu0 0.0
  %356 = vmatmul.mubr.f32.gmra.mrb[0].mxu0 %v69
  %v357 = vpop.f32.mrb[0].mxu0
  %v358 = vadd.f32 %v284, %v357
  %v359 = vpop.f32.mrb[0].mxu0
  %360 = vmatprep.mubr.f32.mxu0 0.0
  %361 = vmatmul.mubr.f32.gmra.mrb[0].mxu0 %v72
  %v362 = vpop.f32.mrb[0].mxu0
  %v363 = vadd.f32 %v284, %v362
  %v364 = vpop.f32.mrb[0].mxu0
  %365 = vmatprep.mubr.f32.mxu0 0.0
  %366 = vmatmul.mubr.f32.gmra.mrb[0].mxu0 %v75
  %v367 = vpop.f32.mrb[0].mxu0
  %v368 = vadd.f32 %v284, %v367
  %v369 = vpop.f32.mrb[0].mxu0
  %370 = vmatprep.mubr.f32.mxu0 0.0
  %371 = vmatmul.mubr.f32.gmra.mrb[0].mxu0 %v78
  %v372 = vpop.f32.mrb[0].mxu0
  %v373 = vadd.f32 %v284, %v372
  %v374 = vpop.f32.mrb[0].mxu0
  %375 = vmatprep.mubr.f32.mxu0 0.0
  %376 = vmatmul.mubr.f32.gmra.mrb[0].mxu0 %v81
  %v377 = vpop.f32.mrb[0].mxu0
  %v378 = vadd.f32 %v284, %v377
  %v379 = vpop.f32.mrb[0].mxu0
  %380 = vmatprep.mubr.f32.mxu0 0.0
  %381 = vmatmul.mubr.f32.gmra.mrb[0].mxu0 %v84
  %v382 = vpop.f32.mrb[0].mxu0
  %v383 = vadd.f32 %v284, %v382
  %v384 = vpop.f32.mrb[0].mxu0
  %385 = vmatprep.mubr.f32.mxu0 0.0
  %386 = vmatmul.mubr.f32.gmra.mrb[0].mxu0 %v87
  %v387 = vpop.f32.mrb[0].mxu0
  %v388 = vadd.f32 %v284, %v387
  %v389 = vpop.f32.mrb[0].mxu0
  %390 = vmatprep.mubr.f32.mxu0 0.0
  %391 = vmatmul.mubr.f32.gmra.mrb[0].mxu0 %v90
  %v392 = vpop.f32.mrb[0].mxu0
  %v393 = vadd.f32 %v284, %v392
  %v394 = vpop.f32.mrb[0].mxu0
  %395 = vmatprep.mubr.f32.mxu0 0.0
  %396 = vmatmul.mubr.f32.gmra.mrb[0].mxu0 %v93
  %v397 = vpop.f32.mrb[0].mxu0
  %v398 = vadd.f32 %v284, %v397
  %v399 = vpop.f32.mrb[0].mxu0
  %400 = vmatprep.mubr.f32.mxu0 0.0
  %401 = vmatmul.mubr.f32.gmra.mrb[0].mxu0 %v96
  %v402 = vpop.f32.mrb[0].mxu0
  %v403 = vadd.f32 %v284, %v402
  %v404 = vpop.f32.mrb[0].mxu0
  %405 = vmatprep.mubr.f32.mxu0 0.0
  %406 = vmatmul.mubr.f32.gmra.mrb[0].mxu0 %v99
  %v407 = vpop.f32.mrb[0].mxu0
  %v408 = vadd.f32 %v284, %v407
  %v409 = vpop.f32.mrb[0].mxu0
  %410 = vmatprep.mubr.f32.mxu0 0.0
  %411 = vmatmul.mubr.f32.gmra.mrb[0].mxu0 %v102
  %v412 = vpop.f32.mrb[0].mxu0
  %v413 = vadd.f32 %v284, %v412
  %v414 = vpop.f32.mrb[0].mxu0
  %415 = vmatprep.mubr.f32.mxu0 0.0
  %416 = vmatmul.mubr.f32.gmra.mrb[0].mxu0 %v105
  %v417 = vpop.f32.mrb[0].mxu0
  %v418 = vadd.f32 %v284, %v417
  %v419 = vpop.f32.mrb[0].mxu0
  %420 = vmatprep.mubr.f32.mxu0 0.0
  %421 = vmatmul.mubr.f32.gmra.mrb[0].mxu0 %v108
  %v422 = vpop.f32.mrb[0].mxu0
  %v423 = vadd.f32 %v284, %v422
  %v424 = vpop.f32.mrb[0].mxu0
  %425 = vmatprep.mubr.f32.mxu0 0.0
  %426 = vmatmul.mubr.f32.gmra.mrb[0].mxu0 %v111
  %v427 = vpop.f32.mrb[0].mxu0
  %v428 = vadd.f32 %v284, %v427
  %v429 = vpop.f32.mrb[0].mxu0
  %430 = vdwg.mxu0
  %431 = vst.msk [vmem:[#allocation3] sm:$0xff] %vm258, %v353
  %432 = vst.msk [vmem:[#allocation3 + $0x8] sm:$0xff] %vm258, %v358
  %433 = vst.msk [vmem:[#allocation3 + $0x10] sm:$0xff] %vm258, %v363
  %434 = vst.msk [vmem:[#allocation3 + $0x18] sm:$0xff] %vm258, %v368
  %435 = vst.msk [vmem:[#allocation3 + $0x20] sm:$0xff] %vm258, %v373
  %436 = vst.msk [vmem:[#allocation3 + $0x28] sm:$0xff] %vm258, %v378
  %437 = vst.msk [vmem:[#allocation3 + $0x30] sm:$0xff] %vm258, %v383
  %438 = vst.msk [vmem:[#allocation3 + $0x38] sm:$0xff] %vm258, %v388
  %439 = vst.msk [vmem:[#allocation3 + $0x40] sm:$0xff] %vm258, %v393
  %440 = vst.msk [vmem:[#allocation3 + $0x48] sm:$0xff] %vm258, %v398
  %441 = vst.msk [vmem:[#allocation3 + $0x50] sm:$0xff] %vm258, %v403
  %442 = vst.msk [vmem:[#allocation3 + $0x58] sm:$0xff] %vm258, %v408
  %443 = vst.msk [vmem:[#allocation3 + $0x60] sm:$0xff] %vm258, %v413
  %444 = vst.msk [vmem:[#allocation3 + $0x68] sm:$0xff] %vm258, %v418
  %445 = vst.msk [vmem:[#allocation3 + $0x70] sm:$0xff] %vm258, %v423
  %446 = vst.msk [vmem:[#allocation3 + $0x78] sm:$0xff] %vm258, %v428
  %447 = vst.msk [vmem:[#allocation4] sm:$0xff] %vm64, 0.0
  %448 = vst.msk [vmem:[#allocation5] sm:$0xff] %vm64, 0.0
  loop: start=0, step=1, limit=16
  $region42: #{encoder_forward.2} parent=0 // loop_pre_header
    _
  $region43: #{encoder_forward.2} parent=0 // loop_header
    %s450 = sphi 0, %s454
    %p451 = scmp.ge.s32.totalorder %s450, 16
  $region44: #{encoder_forward.2} parent=0 // loop_header_branch
    %453 = sbr.rel (%p451) target = $region48
  $region45: #{encoder_forward.2} parent=0 // loop_body
    %s455 = smul.u32 %s450, 8
    %s456 = scalar_lea.vmem %s1, %s455
    %v457 = vld [vmem:[%s456] sm:$0xff]
    %v458 = vld [vmem:[#allocation4] sm:$0xff]
    %s459 = scalar_lea.vmem [#allocation2], %s455
    %v460 = vld [vmem:[%s459] sm:$0xff]
    %v461 = vld [vmem:[%s3] sm:$0xff]
    %v462 = vld [vmem:[%s3 + $0x8] sm:$0xff]
    %v463 = vld [vmem:[%s3 + $0x10] sm:$0xff]
    %v464 = vld [vmem:[%s3 + $0x18] sm:$0xff]
    %v465 = vld [vmem:[%s5] sm:$0x1]
    %v467 = vlaneseq
    %v468 = vshrl.u32 %v467, 7
    %v469 = vsub.s32 0, %v468
    %v470 = vrot.slane %v465, %v469
    %v473 = vsel %vm64, %v458, 0
    %475 = vmatprep.subr.mxu0 0.0
    %476 = vmatpush1.msra.mxu0 %v461
    %477 = vmatprep.subr.mxu0 0.0
    %478 = vmatpush1.msra.mxu0 %v462
    %479 = vmatprep.subr.mxu0 0.0
    %480 = vmatpush1.msra.mxu0 %v463
    %481 = vmatprep.subr.mxu0 0.0
    %482 = vmatpush1.msra.mxu0 %v464
    %483 = vmatprep.subr.mxu0 0.0
    %484 = vmatpush1.msra.mxu0 0.0
    %485 = vmatprep.subr.mxu0 0.0
    %486 = vmatpush1.msra.mxu0 0.0
    %487 = vmatprep.subr.mxu0 0.0
    %488 = vmatpush1.msra.mxu0 0.0
    %489 = vmatprep.subr.mxu0 0.0
    %490 = vmatpush1.msra.mxu0 0.0
    %491 = vmatprep.subr.mxu0 0.0
    %492 = vmatpush1.msra.mxu0 0.0
    %493 = vmatprep.subr.mxu0 0.0
    %494 = vmatpush1.msra.mxu0 0.0
    %495 = vmatprep.subr.mxu0 0.0
    %496 = vmatpush1.msra.mxu0 0.0
    %497 = vmatprep.subr.mxu0 0.0
    %498 = vmatpush1.msra.mxu0 0.0
    %499 = vmatprep.subr.mxu0 0.0
    %500 = vmatpush1.msra.mxu0 0.0
    %501 = vmatprep.subr.mxu0 0.0
    %502 = vmatpush1.msra.mxu0 0.0
    %503 = vmatprep.subr.mxu0 0.0
    %504 = vmatpush1.msra.mxu0 0.0
    %505 = vmatprep.subr.mxu0 0.0
    %506 = vmatpush1.msra.mxu0 0.0
    %507 = vmatprep.subr.mxu0 0.0
    %508 = vmatpush1.msra.mxu0 0.0
    %509 = vmatprep.subr.mxu0 0.0
    %510 = vmatpush1.msra.mxu0 0.0
    %511 = vmatprep.subr.mxu0 0.0
    %512 = vmatpush1.msra.mxu0 0.0
    %513 = vmatprep.subr.mxu0 0.0
    %514 = vmatpush1.msra.mxu0 0.0
    %515 = vmatprep.subr.mxu0 0.0
    %516 = vmatpush1.msra.mxu0 0.0
    %517 = vmatprep.subr.mxu0 0.0
    %518 = vmatpush1.msra.mxu0 0.0
    %519 = vmatprep.subr.mxu0 0.0
    %520 = vmatpush1.msra.mxu0 0.0
    %521 = vmatprep.subr.mxu0 0.0
    %522 = vmatpush1.msra.mxu0 0.0
    %523 = vmatprep.subr.mxu0 0.0
    %524 = vmatpush1.msra.mxu0 0.0
    %525 = vmatprep.subr.mxu0 0.0
    %526 = vmatpush1.msra.mxu0 0.0
    %527 = vmatprep.subr.mxu0 0.0
    %528 = vmatpush1.msra.mxu0 0.0
    %529 = vmatprep.subr.mxu0 0.0
    %530 = vmatpush1.msra.mxu0 0.0
    %531 = vmatprep.subr.mxu0 0.0
    %532 = vmatpush1.msra.mxu0 0.0
    %533 = vmatprep.subr.mxu0 0.0
    %534 = vmatpush1.msra.mxu0 0.0
    %535 = vmatprep.subr.mxu0 0.0
    %536 = vmatpush1.msra.mxu0 0.0
    %537 = vmatprep.subr.mxu0 0.0
    %538 = vmatpush1.msra.mxu0 0.0
    %539 = vmatprep.mubr.f32.mxu0 0.0
    %540 = vmatmul.mubr.f32.gmra.mrb[0].mxu0 %v473
    %v541 = vpop.f32.mrb[0].mxu0
    %v542 = vadd.f32 %v470, %v541
    %v543 = vpop.f32.mrb[0].mxu0
    %544 = vdwg.mxu0
    %v545 = vadd.f32 %v460, %v542
    %v546 = vxor.u32 %v545, 2147483648
    %v547 = vmul.f32 %v546, 1.442695
    %v548 = vpow.pop %v547
    %v549 = vadd.f32 %v548, 1.0
    %v550 = vrcp.pop %v549
    %v551 = vmul.f32 1.0, %v550
    %553 = vrot.lane.b32.xlu0 %v542, 64
    %v554 = vpop.permute.xlu0 %553
    %v556 = vmul.f32 %v551, %v554
    %558 = vrot.lane.b32.xlu0 %v556, 64
    %v559 = vpop.permute.xlu0 %558
    %v561 = vadd.f32 %v460, %v559
    %v562 = vtanh.pop %v561
    %v563 = vsub.f32 1.0, %v551
    %565 = vrot.lane.b32.xlu0 %v562, 96
    %v566 = vpop.permute.xlu0 %565
    %v568 = vmul.f32 %v563, %v566
    %569 = vrot.lane.b32.xlu0 %v458, 32
    %v570 = vpop.permute.xlu0 %569
    %v572 = vmul.f32 %v551, %v570
    %v573 = vadd.f32 %v568, %v572
    %575 = vrot.lane.b32.xlu0 %v457, 32
    %v576 = vpop.permute.xlu0 %575
    %v578 = vmul.f32 %v573, %v576
    %580 = vrot.lane.b32.xlu0 %v578, 96
    %v581 = vpop.permute.xlu0 %580
    %s583 = scalar_lea.vmem %s10, %s455
    %584 = vst.msk [vmem:[%s583] sm:$0xff] %vm64, %v581
    %v585 = vsub.f32 1.0, %v457
    %v586 = vmul.f32 %v458, %v585
    %588 = vrot.lane.b32.xlu0 %v586, 32
    %v589 = vpop.permute.xlu0 %588
    %v591 = vadd.f32 %v578, %v589
    %593 = vrot.lane.b32.xlu0 %v591, 96
    %v594 = vpop.permute.xlu0 %593
    %596 = vst.msk [vmem:[#allocation4] sm:$0xff] %vm64, %v594
    %s597 = ssub.s32 15, %s450
    %s598 = smul.u32 %s597, 8
    %s599 = scalar_lea.vmem %s1, %s598
    %v600 = vld [vmem:[%s599] sm:$0xff]
    %v601 = vld [vmem:[#allocation5] sm:$0xff]
    %s602 = scalar_lea.vmem [#allocation3], %s598
    %v603 = vld [vmem:[%s602] sm:$0xff]
    %v604 = vld [vmem:[%s7] sm:$0xff]
    %v605 = vld [vmem:[%s7 + $0x8] sm:$0xff]
    %v606 = vld [vmem:[%s7 + $0x10] sm:$0xff]
    %v607 = vld [vmem:[%s7 + $0x18] sm:$0xff]
    %v608 = vld [vmem:[%s9] sm:$0x1]
    %v610 = vlaneseq
    %v611 = vshrl.u32 %v610, 7
    %v612 = vsub.s32 0, %v611
    %v613 = vrot.slane %v608, %v612
    %v616 = vsel %vm64, %v601, 0
    %618 = vmatprep.subr.mxu0 0.0
    %619 = vmatpush1.msra.mxu0 %v604
    %620 = vmatprep.subr.mxu0 0.0
    %621 = vmatpush1.msra.mxu0 %v605
    %622 = vmatprep.subr.mxu0 0.0
    %623 = vmatpush1.msra.mxu0 %v606
    %624 = vmatprep.subr.mxu0 0.0
    %625 = vmatpush1.msra.mxu0 %v607
    %626 = vmatprep.subr.mxu0 0.0
    %627 = vmatpush1.msra.mxu0 0.0
    %628 = vmatprep.subr.mxu0 0.0
    %629 = vmatpush1.msra.mxu0 0.0
    %630 = vmatprep.subr.mxu0 0.0
    %631 = vmatpush1.msra.mxu0 0.0
    %632 = vmatprep.subr.mxu0 0.0
    %633 = vmatpush1.msra.mxu0 0.0
    %634 = vmatprep.subr.mxu0 0.0
    %635 = vmatpush1.msra.mxu0 0.0
    %636 = vmatprep.subr.mxu0 0.0
    %637 = vmatpush1.msra.mxu0 0.0
    %638 = vmatprep.subr.mxu0 0.0
    %639 = vmatpush1.msra.mxu0 0.0
    %640 = vmatprep.subr.mxu0 0.0
    %641 = vmatpush1.msra.mxu0 0.0
    %642 = vmatprep.subr.mxu0 0.0
    %643 = vmatpush1.msra.mxu0 0.0
    %644 = vmatprep.subr.mxu0 0.0
    %645 = vmatpush1.msra.mxu0 0.0
    %646 = vmatprep.subr.mxu0 0.0
    %647 = vmatpush1.msra.mxu0 0.0
    %648 = vmatprep.subr.mxu0 0.0
    %649 = vmatpush1.msra.mxu0 0.0
    %650 = vmatprep.subr.mxu0 0.0
    %651 = vmatpush1.msra.mxu0 0.0
    %652 = vmatprep.subr.mxu0 0.0
    %653 = vmatpush1.msra.mxu0 0.0
    %654 = vmatprep.subr.mxu0 0.0
    %655 = vmatpush1.msra.mxu0 0.0
    %656 = vmatprep.subr.mxu0 0.0
    %657 = vmatpush1.msra.mxu0 0.0
    %658 = vmatprep.subr.mxu0 0.0
    %659 = vmatpush1.msra.mxu0 0.0
    %660 = vmatprep.subr.mxu0 0.0
    %661 = vmatpush1.msra.mxu0 0.0
    %662 = vmatprep.subr.mxu0 0.0
    %663 = vmatpush1.msra.mxu0 0.0
    %664 = vmatprep.subr.mxu0 0.0
    %665 = vmatpush1.msra.mxu0 0.0
    %666 = vmatprep.subr.mxu0 0.0
    %667 = vmatpush1.msra.mxu0 0.0
    %668 = vmatprep.subr.mxu0 0.0
    %669 = vmatpush1.msra.mxu0 0.0
    %670 = vmatprep.subr.mxu0 0.0
    %671 = vmatpush1.msra.mxu0 0.0
    %672 = vmatprep.subr.mxu0 0.0
    %673 = vmatpush1.msra.mxu0 0.0
    %674 = vmatprep.subr.mxu0 0.0
    %675 = vmatpush1.msra.mxu0 0.0
    %676 = vmatprep.subr.mxu0 0.0
    %677 = vmatpush1.msra.mxu0 0.0
    %678 = vmatprep.subr.mxu0 0.0
    %679 = vmatpush1.msra.mxu0 0.0
    %680 = vmatprep.subr.mxu0 0.0
    %681 = vmatpush1.msra.mxu0 0.0
    %682 = vmatprep.mubr.f32.mxu0 0.0
    %683 = vmatmul.mubr.f32.gmra.mrb[0].mxu0 %v616
    %v684 = vpop.f32.mrb[0].mxu0
    %v685 = vadd.f32 %v613, %v684
    %v686 = vpop.f32.mrb[0].mxu0
    %687 = vdwg.mxu0
    %v688 = vadd.f32 %v603, %v685
    %v689 = vxor.u32 %v688, 2147483648
    %v690 = vmul.f32 %v689, 1.442695
    %v691 = vpow.pop %v690
    %v692 = vadd.f32 %v691, 1.0
    %v693 = vrcp.pop %v692
    %v694 = vmul.f32 1.0, %v693
    %696 = vrot.lane.b32.xlu0 %v685, 64
    %v697 = vpop.permute.xlu0 %696
    %v699 = vmul.f32 %v694, %v697
    %701 = vrot.lane.b32.xlu0 %v699, 64
    %v702 = vpop.permute.xlu0 %701
    %v704 = vadd.f32 %v603, %v702
    %v705 = vtanh.pop %v704
    %v706 = vsub.f32 1.0, %v694
    %708 = vrot.lane.b32.xlu0 %v705, 96
    %v709 = vpop.permute.xlu0 %708
    %v711 = vmul.f32 %v706, %v709
    %712 = vrot.lane.b32.xlu0 %v601, 32
    %v713 = vpop.permute.xlu0 %712
    %v715 = vmul.f32 %v694, %v713
    %v716 = vadd.f32 %v711, %v715
    %718 = vrot.lane.b32.xlu0 %v600, 32
    %v719 = vpop.permute.xlu0 %718
    %v721 = vmul.f32 %v716, %v719
    %723 = vrot.lane.b32.xlu0 %v721, 96
    %v724 = vpop.permute.xlu0 %723
    %s726 = scalar_lea.vmem %s11, %s598
    %727 = vst.msk [vmem:[%s726] sm:$0xff] %vm64, %v724
    %v728 = vsub.f32 1.0, %v600
    %v729 = vmul.f32 %v601, %v728
    %731 = vrot.lane.b32.xlu0 %v729, 32
    %v732 = vpop.permute.xlu0 %731
    %v734 = vadd.f32 %v721, %v732
    %736 = vrot.lane.b32.xlu0 %v734, 96
    %v737 = vpop.permute.xlu0 %736
    %739 = vst.msk [vmem:[#allocation5] sm:$0xff] %vm64, %v737
  $region46: #{encoder_forward.2} parent=0 // loop_footer
    %s454 = sadd.s32 1, %s450
  $region47: #{encoder_forward.2} parent=0 // loop_footer_branch
    %449 = sbr.rel target = $region43
  $region48: #{encoder_forward.2} parent=0 // loop_exit
    _
  // Predicated region
  $region49: #{encoder_forward.2} parent=0 // pred_check
    _
  $region50: #{encoder_forward.2} parent=0 // pred_check_branch
    %741 = sbr.rel (0) target = $region52
  $region51: #{encoder_forward.2} parent=0 // pred_region
    _
  $region52: #{encoder_forward.2} parent=0 // pred_fallthru
    _
  // Predicated region
  $region53: #{encoder_forward.2} parent=0 // pred_check
    _
  $region54: #{encoder_forward.2} parent=0 // pred_check_branch
    %743 = sbr.rel (0) target = $region56
  $region55: #{encoder_forward.2} parent=0 // pred_region
    _
  $region56: #{encoder_forward.2} parent=0 // pred_fallthru
    _
  // Predicated region
  $region57: #{encoder_forward.2} parent=0 // pred_check
    _
  $region58: #{encoder_forward.2} parent=0 // pred_check_branch
    %745 = sbr.rel (0) target = $region60
  $region59: #{encoder_forward.2} parent=0 // pred_region
    _
  $region60: #{encoder_forward.2} parent=0 // pred_fallthru
    _
  // Predicated region
  $region61: #{encoder_forward.2} parent=0 // pred_check
    _
  $region62: #{encoder_forward.2} parent=0 // pred_check_branch
    %747 = sbr.rel (0) target = $region64
  $region63: #{encoder_forward.2} parent=0 // pred_region
    _
  $region64: #{encoder_forward.2} parent=0 // pred_fallthru
    _

</llo_original>
